<compile_context>
chip_gen: v6e
topology: v6e:2x2x1
jax: 0.10.0
libtpu: 0.0.40
codegen_flags: <defaults>
</compile_context>

<pallas_src>
import functools

import jax
import jax.numpy as jnp
from jax import lax
from jax.experimental import pallas as pl
from jax.experimental.pallas import tpu as pltpu


# ----------------------------------------------------------------------------
# Fused kernel: LSTM recurrence + Linear -> BatchNorm1d -> ReLU -> Linear head.
# Single invocation, everything resident in VMEM.
# ----------------------------------------------------------------------------
def _fused_lstm_head_kernel(
    x_ref,       # (T*B, Din)  flattened sequence-major input
    wih_ref,     # (Din, 4H)
    whh_ref,     # (H, 4H)
    b_ref,       # (1, 4H)     b_ih + b_hh folded
    w1_ref,      # (H, H2)
    b1_ref,      # (1, H2)
    gamma_ref,   # (1, H2)
    beta_ref,    # (1, H2)
    w2_ref,      # (1, H2)     final linear weight stored as a row
    b2_ref,      # (1, 1)
    out_ref,     # (T*B, 128)  lane-dense output slab; column 0 holds the result
    hseq_scr,    # VMEM scratch (T*B, H)
    *, T, B,
):
    H = whh_ref.shape[0]

    # Hoisted input projection (+ bias): one matmul outside the recurrence.
    xw = (
        jnp.dot(x_ref[...], wih_ref[...], preferred_element_type=jnp.float32)
        + b_ref[...]
    )  # (T*B, 4H)

    whh = whh_ref[...]
    h = jnp.zeros((B, H), jnp.float32)
    c = jnp.zeros((B, H), jnp.float32)

    # Fully unrolled recurrence over time: the only serialized MXU op is h @ W_hh.
    for t in range(T):
        gates = xw[t * B:(t + 1) * B, :] + jnp.dot(
            h, whh, preferred_element_type=jnp.float32
        )  # (B, 4H) — exactly one 128-lane tile wide

        # Full-width activations, then pick gates with lane slices (i, f, g, o).
        sig = jax.nn.sigmoid(gates)
        tg = jnp.tanh(gates)
        i_g = sig[:, 0 * H:1 * H]
        f_g = sig[:, 1 * H:2 * H]
        o_g = sig[:, 3 * H:4 * H]
        g_g = tg[:, 2 * H:3 * H]

        c = f_g * c + i_g * g_g
        h = o_g * jnp.tanh(c)
        hseq_scr[t * B:(t + 1) * B, :] = h

    # ---- Head: Linear(H -> H/2) -> BatchNorm1d (training-mode batch stats,
    #            biased variance, eps=1e-5) -> ReLU -> Linear(H/2 -> 1)
    h_all = hseq_scr[...]                                                   # (T*B, H)
    z = jnp.dot(h_all, w1_ref[...], preferred_element_type=jnp.float32) + b1_ref[...]
    mean = jnp.mean(z, axis=0, keepdims=True)
    var = jnp.mean((z - mean) ** 2, axis=0, keepdims=True)
    zn = (z - mean) * lax.rsqrt(var + 1e-5) * gamma_ref[...] + beta_ref[...]
    a = jnp.maximum(zn, 0.0)

    # Final (H2 -> 1) projection as a VPU row-reduction (no 1-column MXU matmul).
    out_col = jnp.sum(a * w2_ref[...], axis=-1, keepdims=True) + b2_ref[...]  # (T*B, 1)

    # Lane-dense, unmasked store; the wrapper slices column 0.
    out_ref[...] = jnp.broadcast_to(out_col, out_ref.shape).astype(out_ref.dtype)


# ----------------------------------------------------------------------------
# Wrapper: one pallas_call for the full module forward.
# ----------------------------------------------------------------------------
@jax.jit
def rnn_lstm_forward(x, params):
    T, B, Din = x.shape
    H = params["w_hh_t"].shape[0]
    N = T * B

    kernel = functools.partial(_fused_lstm_head_kernel, T=T, B=B)
    out_slab = pl.pallas_call(
        kernel,
        out_shape=jax.ShapeDtypeStruct((N, 128), jnp.float32),
        scratch_shapes=[pltpu.VMEM((N, H), jnp.float32)],  # h_seq kept in VMEM
    )(
        x.reshape(N, Din),            # sequence-major flatten (t0b0, t0b1, t1b0, ...)
        params["w_ih_t"], params["w_hh_t"], params["b_lstm"],
        params["w1_t"], params["b1"],
        params["bn_gamma"], params["bn_beta"],
        params["w2_row"], params["b2"],
    )
    return out_slab[:, :1]            # (T*B, 1), matching the PyTorch module output


# ----------------------------------------------------------------------------
# Pure-JAX reference (sanity check only).
# ----------------------------------------------------------------------------
def rnn_lstm_reference(x, params):
    T, B, _ = x.shape
    H = params["w_hh_t"].shape[0]

    def step(carry, x_t):
        h, c = carry
        gates = x_t @ params["w_ih_t"] + h @ params["w_hh_t"] + params["b_lstm"]
        i = jax.nn.sigmoid(gates[:, 0 * H:1 * H])
        f = jax.nn.sigmoid(gates[:, 1 * H:2 * H])
        g = jnp.tanh(gates[:, 2 * H:3 * H])
        o = jax.nn.sigmoid(gates[:, 3 * H:4 * H])
        c = f * c + i * g
        h = o * jnp.tanh(c)
        return (h, c), h

    h0 = jnp.zeros((B, H), jnp.float32)
    (_, _), h_seq = lax.scan(step, (h0, h0), x)
    z = h_seq.reshape(T * B, H) @ params["w1_t"] + params["b1"]
    mean = jnp.mean(z, axis=0, keepdims=True)
    var = jnp.mean((z - mean) ** 2, axis=0, keepdims=True)
    zn = (z - mean) * lax.rsqrt(var + 1e-5) * params["bn_gamma"] + params["bn_beta"]
    a = jnp.maximum(zn, 0.0)
    return a @ params["w2_row"].T + params["b2"]


def init_params(key, input_dim, hidden_dim):
    H = hidden_dim
    H2 = H // 2
    ks = jax.random.split(key, 8)
    k_lstm = 1.0 / jnp.sqrt(H)
    k_fc1 = 1.0 / jnp.sqrt(H)
    k_fc2 = 1.0 / jnp.sqrt(H2)
    u = lambda k, shape, scale: jax.random.uniform(k, shape, jnp.float32, -scale, scale)
    return {
        # LSTM weights pre-transposed: (Din, 4H) and (H, 4H); gate order i, f, g, o.
        "w_ih_t": u(ks[0], (input_dim, 4 * H), k_lstm),
        "w_hh_t": u(ks[1], (H, 4 * H), k_lstm),
        # b_ih + b_hh folded into one bias, kept 2-D for lane layout.
        "b_lstm": u(ks[2], (1, 4 * H), k_lstm) + u(ks[3], (1, 4 * H), k_lstm),
        "w1_t": u(ks[4], (H, H2), k_fc1),
        "b1": u(ks[5], (1, H2), k_fc1),
        "bn_gamma": jnp.ones((1, H2), jnp.float32),
        "bn_beta": jnp.zeros((1, H2), jnp.float32),
        # Final linear stored as a row for the in-kernel row-reduction.
        "w2_row": u(ks[6], (1, H2), k_fc2),
        "b2": u(ks[7], (1, 1), k_fc2),
    }


if __name__ == "__main__":
    # Small shapes consistent with the module: seq=8, batch=2, input_dim=4, hidden_dim=32.
    T, B, INPUT_DIM, HIDDEN_DIM = 8, 2, 4, 32

    key = jax.random.PRNGKey(0)
    k_x, k_p = jax.random.split(key)
    x = jax.random.normal(k_x, (T, B, INPUT_DIM), jnp.float32)
    params = init_params(k_p, INPUT_DIM, HIDDEN_DIM)

    out = rnn_lstm_forward(x, params)
    out = jax.block_until_ready(out)
    assert out.shape == (T * B, 1), out.shape

    ref = rnn_lstm_reference(x, params)
    assert jnp.allclose(out, ref, atol=1e-3, rtol=1e-3), (
        float(jnp.max(jnp.abs(out - ref)))
    )

    print("KERNEL_OK")
</pallas_src>

<mosaic_0001>
module attributes {stable_mosaic.version = 11 : i64} {
  func.func @_fused_lstm_head_kernel(%arg0: memref<16x4xf32, #tpu.memory_space<vmem>>, %arg1: memref<4x128xf32, #tpu.memory_space<vmem>>, %arg2: memref<32x128xf32, #tpu.memory_space<vmem>>, %arg3: memref<1x128xf32, #tpu.memory_space<vmem>>, %arg4: memref<32x16xf32, #tpu.memory_space<vmem>>, %arg5: memref<1x16xf32, #tpu.memory_space<vmem>>, %arg6: memref<1x16xf32, #tpu.memory_space<vmem>>, %arg7: memref<1x16xf32, #tpu.memory_space<vmem>>, %arg8: memref<1x16xf32, #tpu.memory_space<vmem>>, %arg9: memref<1x1xf32, #tpu.memory_space<vmem>>, %arg10: memref<16x128xf32, #tpu.memory_space<vmem>>, %arg11: memref<16x32xf32, #tpu.memory_space<vmem>>) attributes {dimension_semantics = [], scalar_prefetch = 0 : i64, scratch_operands = 1 : i64, tpu.core_type = #tpu.core_type<tc>} {
    %c0 = arith.constant 0 : index
    %c0_0 = arith.constant 0 : index
    %0 = vector.load %arg0[%c0, %c0_0] : memref<16x4xf32, #tpu.memory_space<vmem>>, vector<16x4xf32>
    %c0_1 = arith.constant 0 : index
    %c0_2 = arith.constant 0 : index
    %1 = vector.load %arg1[%c0_1, %c0_2] : memref<4x128xf32, #tpu.memory_space<vmem>>, vector<4x128xf32>
    %cst = arith.constant dense<0.000000e+00> : vector<16x128xf32>
    %2 = tpu.matmul %0, %1, %cst {dimension_numbers = #tpu.dot_dimension_numbers<[1], [0], [0], [1], [0, 0, 1, 1], [], []>} : vector<16x4xf32>, vector<4x128xf32>, vector<16x128xf32> -> vector<16x128xf32>
    %c0_3 = arith.constant 0 : index
    %c0_4 = arith.constant 0 : index
    %3 = vector.load %arg3[%c0_3, %c0_4] : memref<1x128xf32, #tpu.memory_space<vmem>>, vector<1x128xf32>
    %4 = vector.broadcast %3 : vector<1x128xf32> to vector<16x128xf32>
    %5 = arith.addf %2, %4 : vector<16x128xf32>
    %c0_5 = arith.constant 0 : index
    %c0_6 = arith.constant 0 : index
    %6 = vector.load %arg2[%c0_5, %c0_6] : memref<32x128xf32, #tpu.memory_space<vmem>>, vector<32x128xf32>
    %cst_7 = arith.constant 0.000000e+00 : f32
    %7 = vector.broadcast %cst_7 : f32 to vector<2x32xf32>
    %cst_8 = arith.constant 0.000000e+00 : f32
    %8 = vector.broadcast %cst_8 : f32 to vector<2x32xf32>
    %9 = vector.extract_strided_slice %5 {offsets = [0, 0], sizes = [2, 128], strides = [1, 1]} : vector<16x128xf32> to vector<2x128xf32>
    %cst_9 = arith.constant dense<0.000000e+00> : vector<2x128xf32>
    %10 = tpu.matmul %7, %6, %cst_9 {dimension_numbers = #tpu.dot_dimension_numbers<[1], [0], [0], [1], [0, 0, 1, 1], [], []>} : vector<2x32xf32>, vector<32x128xf32>, vector<2x128xf32> -> vector<2x128xf32>
    %11 = arith.addf %9, %10 : vector<2x128xf32>
    %12 = arith.negf %11 : vector<2x128xf32>
    %13 = math.exp %12 : vector<2x128xf32>
    %cst_10 = arith.constant 1.000000e+00 : f32
    %14 = vector.broadcast %cst_10 : f32 to vector<2x128xf32>
    %15 = arith.addf %14, %13 : vector<2x128xf32>
    %16 = arith.divf %14, %15 : vector<2x128xf32>
    %17 = math.tanh %11 : vector<2x128xf32>
    %18 = vector.extract_strided_slice %16 {offsets = [0, 0], sizes = [2, 32], strides = [1, 1]} : vector<2x128xf32> to vector<2x32xf32>
    %19 = vector.extract_strided_slice %16 {offsets = [0, 32], sizes = [2, 32], strides = [1, 1]} : vector<2x128xf32> to vector<2x32xf32>
    %20 = vector.extract_strided_slice %16 {offsets = [0, 96], sizes = [2, 32], strides = [1, 1]} : vector<2x128xf32> to vector<2x32xf32>
    %21 = vector.extract_strided_slice %17 {offsets = [0, 64], sizes = [2, 32], strides = [1, 1]} : vector<2x128xf32> to vector<2x32xf32>
    %22 = arith.mulf %19, %8 : vector<2x32xf32>
    %23 = arith.mulf %18, %21 : vector<2x32xf32>
    %24 = arith.addf %22, %23 : vector<2x32xf32>
    %25 = math.tanh %24 : vector<2x32xf32>
    %26 = arith.mulf %20, %25 : vector<2x32xf32>
    %c0_11 = arith.constant 0 : index
    %c0_12 = arith.constant 0 : index
    %27 = vector.load %arg11[%c0_11, %c0_12] : memref<16x32xf32, #tpu.memory_space<vmem>>, vector<2x32xf32>
    tpu.vector_store %arg11[%c0_11, %c0_12], %26 {strides = array<i32>} : memref<16x32xf32, #tpu.memory_space<vmem>>, vector<2x32xf32>,
    %28 = vector.extract_strided_slice %5 {offsets = [2, 0], sizes = [2, 128], strides = [1, 1]} : vector<16x128xf32> to vector<2x128xf32>
    %cst_13 = arith.constant dense<0.000000e+00> : vector<2x128xf32>
    %29 = tpu.matmul %26, %6, %cst_13 {dimension_numbers = #tpu.dot_dimension_numbers<[1], [0], [0], [1], [0, 0, 1, 1], [], []>} : vector<2x32xf32>, vector<32x128xf32>, vector<2x128xf32> -> vector<2x128xf32>
    %30 = arith.addf %28, %29 : vector<2x128xf32>
    %31 = arith.negf %30 : vector<2x128xf32>
    %32 = math.exp %31 : vector<2x128xf32>
    %cst_14 = arith.constant 1.000000e+00 : f32
    %33 = vector.broadcast %cst_14 : f32 to vector<2x128xf32>
    %34 = arith.addf %33, %32 : vector<2x128xf32>
    %35 = arith.divf %33, %34 : vector<2x128xf32>
    %36 = math.tanh %30 : vector<2x128xf32>
    %37 = vector.extract_strided_slice %35 {offsets = [0, 0], sizes = [2, 32], strides = [1, 1]} : vector<2x128xf32> to vector<2x32xf32>
    %38 = vector.extract_strided_slice %35 {offsets = [0, 32], sizes = [2, 32], strides = [1, 1]} : vector<2x128xf32> to vector<2x32xf32>
    %39 = vector.extract_strided_slice %35 {offsets = [0, 96], sizes = [2, 32], strides = [1, 1]} : vector<2x128xf32> to vector<2x32xf32>
    %40 = vector.extract_strided_slice %36 {offsets = [0, 64], sizes = [2, 32], strides = [1, 1]} : vector<2x128xf32> to vector<2x32xf32>
    %41 = arith.mulf %38, %24 : vector<2x32xf32>
    %42 = arith.mulf %37, %40 : vector<2x32xf32>
    %43 = arith.addf %41, %42 : vector<2x32xf32>
    %44 = math.tanh %43 : vector<2x32xf32>
    %45 = arith.mulf %39, %44 : vector<2x32xf32>
    %c2 = arith.constant 2 : index
    %c0_15 = arith.constant 0 : index
    %46 = vector.load %arg11[%c2, %c0_15] : memref<16x32xf32, #tpu.memory_space<vmem>>, vector<2x32xf32>
    tpu.vector_store %arg11[%c2, %c0_15], %45 {strides = array<i32>} : memref<16x32xf32, #tpu.memory_space<vmem>>, vector<2x32xf32>,
    %47 = vector.extract_strided_slice %5 {offsets = [4, 0], sizes = [2, 128], strides = [1, 1]} : vector<16x128xf32> to vector<2x128xf32>
    %cst_16 = arith.constant dense<0.000000e+00> : vector<2x128xf32>
    %48 = tpu.matmul %45, %6, %cst_16 {dimension_numbers = #tpu.dot_dimension_numbers<[1], [0], [0], [1], [0, 0, 1, 1], [], []>} : vector<2x32xf32>, vector<32x128xf32>, vector<2x128xf32> -> vector<2x128xf32>
    %49 = arith.addf %47, %48 : vector<2x128xf32>
    %50 = arith.negf %49 : vector<2x128xf32>
    %51 = math.exp %50 : vector<2x128xf32>
    %cst_17 = arith.constant 1.000000e+00 : f32
    %52 = vector.broadcast %cst_17 : f32 to vector<2x128xf32>
    %53 = arith.addf %52, %51 : vector<2x128xf32>
    %54 = arith.divf %52, %53 : vector<2x128xf32>
    %55 = math.tanh %49 : vector<2x128xf32>
    %56 = vector.extract_strided_slice %54 {offsets = [0, 0], sizes = [2, 32], strides = [1, 1]} : vector<2x128xf32> to vector<2x32xf32>
    %57 = vector.extract_strided_slice %54 {offsets = [0, 32], sizes = [2, 32], strides = [1, 1]} : vector<2x128xf32> to vector<2x32xf32>
    %58 = vector.extract_strided_slice %54 {offsets = [0, 96], sizes = [2, 32], strides = [1, 1]} : vector<2x128xf32> to vector<2x32xf32>
    %59 = vector.extract_strided_slice %55 {offsets = [0, 64], sizes = [2, 32], strides = [1, 1]} : vector<2x128xf32> to vector<2x32xf32>
    %60 = arith.mulf %57, %43 : vector<2x32xf32>
    %61 = arith.mulf %56, %59 : vector<2x32xf32>
    %62 = arith.addf %60, %61 : vector<2x32xf32>
    %63 = math.tanh %62 : vector<2x32xf32>
    %64 = arith.mulf %58, %63 : vector<2x32xf32>
    %c4 = arith.constant 4 : index
    %c0_18 = arith.constant 0 : index
    %65 = vector.load %arg11[%c4, %c0_18] : memref<16x32xf32, #tpu.memory_space<vmem>>, vector<2x32xf32>
    tpu.vector_store %arg11[%c4, %c0_18], %64 {strides = array<i32>} : memref<16x32xf32, #tpu.memory_space<vmem>>, vector<2x32xf32>,
    %66 = vector.extract_strided_slice %5 {offsets = [6, 0], sizes = [2, 128], strides = [1, 1]} : vector<16x128xf32> to vector<2x128xf32>
    %cst_19 = arith.constant dense<0.000000e+00> : vector<2x128xf32>
    %67 = tpu.matmul %64, %6, %cst_19 {dimension_numbers = #tpu.dot_dimension_numbers<[1], [0], [0], [1], [0, 0, 1, 1], [], []>} : vector<2x32xf32>, vector<32x128xf32>, vector<2x128xf32> -> vector<2x128xf32>
    %68 = arith.addf %66, %67 : vector<2x128xf32>
    %69 = arith.negf %68 : vector<2x128xf32>
    %70 = math.exp %69 : vector<2x128xf32>
    %cst_20 = arith.constant 1.000000e+00 : f32
    %71 = vector.broadcast %cst_20 : f32 to vector<2x128xf32>
    %72 = arith.addf %71, %70 : vector<2x128xf32>
    %73 = arith.divf %71, %72 : vector<2x128xf32>
    %74 = math.tanh %68 : vector<2x128xf32>
    %75 = vector.extract_strided_slice %73 {offsets = [0, 0], sizes = [2, 32], strides = [1, 1]} : vector<2x128xf32> to vector<2x32xf32>
    %76 = vector.extract_strided_slice %73 {offsets = [0, 32], sizes = [2, 32], strides = [1, 1]} : vector<2x128xf32> to vector<2x32xf32>
    %77 = vector.extract_strided_slice %73 {offsets = [0, 96], sizes = [2, 32], strides = [1, 1]} : vector<2x128xf32> to vector<2x32xf32>
    %78 = vector.extract_strided_slice %74 {offsets = [0, 64], sizes = [2, 32], strides = [1, 1]} : vector<2x128xf32> to vector<2x32xf32>
    %79 = arith.mulf %76, %62 : vector<2x32xf32>
    %80 = arith.mulf %75, %78 : vector<2x32xf32>
    %81 = arith.addf %79, %80 : vector<2x32xf32>
    %82 = math.tanh %81 : vector<2x32xf32>
    %83 = arith.mulf %77, %82 : vector<2x32xf32>
    %c6 = arith.constant 6 : index
    %c0_21 = arith.constant 0 : index
    %84 = vector.load %arg11[%c6, %c0_21] : memref<16x32xf32, #tpu.memory_space<vmem>>, vector<2x32xf32>
    tpu.vector_store %arg11[%c6, %c0_21], %83 {strides = array<i32>} : memref<16x32xf32, #tpu.memory_space<vmem>>, vector<2x32xf32>,
    %85 = vector.extract_strided_slice %5 {offsets = [8, 0], sizes = [2, 128], strides = [1, 1]} : vector<16x128xf32> to vector<2x128xf32>
    %cst_22 = arith.constant dense<0.000000e+00> : vector<2x128xf32>
    %86 = tpu.matmul %83, %6, %cst_22 {dimension_numbers = #tpu.dot_dimension_numbers<[1], [0], [0], [1], [0, 0, 1, 1], [], []>} : vector<2x32xf32>, vector<32x128xf32>, vector<2x128xf32> -> vector<2x128xf32>
    %87 = arith.addf %85, %86 : vector<2x128xf32>
    %88 = arith.negf %87 : vector<2x128xf32>
    %89 = math.exp %88 : vector<2x128xf32>
    %cst_23 = arith.constant 1.000000e+00 : f32
    %90 = vector.broadcast %cst_23 : f32 to vector<2x128xf32>
    %91 = arith.addf %90, %89 : vector<2x128xf32>
    %92 = arith.divf %90, %91 : vector<2x128xf32>
    %93 = math.tanh %87 : vector<2x128xf32>
    %94 = vector.extract_strided_slice %92 {offsets = [0, 0], sizes = [2, 32], strides = [1, 1]} : vector<2x128xf32> to vector<2x32xf32>
    %95 = vector.extract_strided_slice %92 {offsets = [0, 32], sizes = [2, 32], strides = [1, 1]} : vector<2x128xf32> to vector<2x32xf32>
    %96 = vector.extract_strided_slice %92 {offsets = [0, 96], sizes = [2, 32], strides = [1, 1]} : vector<2x128xf32> to vector<2x32xf32>
    %97 = vector.extract_strided_slice %93 {offsets = [0, 64], sizes = [2, 32], strides = [1, 1]} : vector<2x128xf32> to vector<2x32xf32>
    %98 = arith.mulf %95, %81 : vector<2x32xf32>
    %99 = arith.mulf %94, %97 : vector<2x32xf32>
    %100 = arith.addf %98, %99 : vector<2x32xf32>
    %101 = math.tanh %100 : vector<2x32xf32>
    %102 = arith.mulf %96, %101 : vector<2x32xf32>
    %c8 = arith.constant 8 : index
    %c0_24 = arith.constant 0 : index
    %103 = vector.load %arg11[%c8, %c0_24] : memref<16x32xf32, #tpu.memory_space<vmem>>, vector<2x32xf32>
    tpu.vector_store %arg11[%c8, %c0_24], %102 {strides = array<i32>} : memref<16x32xf32, #tpu.memory_space<vmem>>, vector<2x32xf32>,
    %104 = vector.extract_strided_slice %5 {offsets = [10, 0], sizes = [2, 128], strides = [1, 1]} : vector<16x128xf32> to vector<2x128xf32>
    %cst_25 = arith.constant dense<0.000000e+00> : vector<2x128xf32>
    %105 = tpu.matmul %102, %6, %cst_25 {dimension_numbers = #tpu.dot_dimension_numbers<[1], [0], [0], [1], [0, 0, 1, 1], [], []>} : vector<2x32xf32>, vector<32x128xf32>, vector<2x128xf32> -> vector<2x128xf32>
    %106 = arith.addf %104, %105 : vector<2x128xf32>
    %107 = arith.negf %106 : vector<2x128xf32>
    %108 = math.exp %107 : vector<2x128xf32>
    %cst_26 = arith.constant 1.000000e+00 : f32
    %109 = vector.broadcast %cst_26 : f32 to vector<2x128xf32>
    %110 = arith.addf %109, %108 : vector<2x128xf32>
    %111 = arith.divf %109, %110 : vector<2x128xf32>
    %112 = math.tanh %106 : vector<2x128xf32>
    %113 = vector.extract_strided_slice %111 {offsets = [0, 0], sizes = [2, 32], strides = [1, 1]} : vector<2x128xf32> to vector<2x32xf32>
    %114 = vector.extract_strided_slice %111 {offsets = [0, 32], sizes = [2, 32], strides = [1, 1]} : vector<2x128xf32> to vector<2x32xf32>
    %115 = vector.extract_strided_slice %111 {offsets = [0, 96], sizes = [2, 32], strides = [1, 1]} : vector<2x128xf32> to vector<2x32xf32>
    %116 = vector.extract_strided_slice %112 {offsets = [0, 64], sizes = [2, 32], strides = [1, 1]} : vector<2x128xf32> to vector<2x32xf32>
    %117 = arith.mulf %114, %100 : vector<2x32xf32>
    %118 = arith.mulf %113, %116 : vector<2x32xf32>
    %119 = arith.addf %117, %118 : vector<2x32xf32>
    %120 = math.tanh %119 : vector<2x32xf32>
    %121 = arith.mulf %115, %120 : vector<2x32xf32>
    %c10 = arith.constant 10 : index
    %c0_27 = arith.constant 0 : index
    %122 = vector.load %arg11[%c10, %c0_27] : memref<16x32xf32, #tpu.memory_space<vmem>>, vector<2x32xf32>
    tpu.vector_store %arg11[%c10, %c0_27], %121 {strides = array<i32>} : memref<16x32xf32, #tpu.memory_space<vmem>>, vector<2x32xf32>,
    %123 = vector.extract_strided_slice %5 {offsets = [12, 0], sizes = [2, 128], strides = [1, 1]} : vector<16x128xf32> to vector<2x128xf32>
    %cst_28 = arith.constant dense<0.000000e+00> : vector<2x128xf32>
    %124 = tpu.matmul %121, %6, %cst_28 {dimension_numbers = #tpu.dot_dimension_numbers<[1], [0], [0], [1], [0, 0, 1, 1], [], []>} : vector<2x32xf32>, vector<32x128xf32>, vector<2x128xf32> -> vector<2x128xf32>
    %125 = arith.addf %123, %124 : vector<2x128xf32>
    %126 = arith.negf %125 : vector<2x128xf32>
    %127 = math.exp %126 : vector<2x128xf32>
    %cst_29 = arith.constant 1.000000e+00 : f32
    %128 = vector.broadcast %cst_29 : f32 to vector<2x128xf32>
    %129 = arith.addf %128, %127 : vector<2x128xf32>
    %130 = arith.divf %128, %129 : vector<2x128xf32>
    %131 = math.tanh %125 : vector<2x128xf32>
    %132 = vector.extract_strided_slice %130 {offsets = [0, 0], sizes = [2, 32], strides = [1, 1]} : vector<2x128xf32> to vector<2x32xf32>
    %133 = vector.extract_strided_slice %130 {offsets = [0, 32], sizes = [2, 32], strides = [1, 1]} : vector<2x128xf32> to vector<2x32xf32>
    %134 = vector.extract_strided_slice %130 {offsets = [0, 96], sizes = [2, 32], strides = [1, 1]} : vector<2x128xf32> to vector<2x32xf32>
    %135 = vector.extract_strided_slice %131 {offsets = [0, 64], sizes = [2, 32], strides = [1, 1]} : vector<2x128xf32> to vector<2x32xf32>
    %136 = arith.mulf %133, %119 : vector<2x32xf32>
    %137 = arith.mulf %132, %135 : vector<2x32xf32>
    %138 = arith.addf %136, %137 : vector<2x32xf32>
    %139 = math.tanh %138 : vector<2x32xf32>
    %140 = arith.mulf %134, %139 : vector<2x32xf32>
    %c12 = arith.constant 12 : index
    %c0_30 = arith.constant 0 : index
    %141 = vector.load %arg11[%c12, %c0_30] : memref<16x32xf32, #tpu.memory_space<vmem>>, vector<2x32xf32>
    tpu.vector_store %arg11[%c12, %c0_30], %140 {strides = array<i32>} : memref<16x32xf32, #tpu.memory_space<vmem>>, vector<2x32xf32>,
    %142 = vector.extract_strided_slice %5 {offsets = [14, 0], sizes = [2, 128], strides = [1, 1]} : vector<16x128xf32> to vector<2x128xf32>
    %cst_31 = arith.constant dense<0.000000e+00> : vector<2x128xf32>
    %143 = tpu.matmul %140, %6, %cst_31 {dimension_numbers = #tpu.dot_dimension_numbers<[1], [0], [0], [1], [0, 0, 1, 1], [], []>} : vector<2x32xf32>, vector<32x128xf32>, vector<2x128xf32> -> vector<2x128xf32>
    %144 = arith.addf %142, %143 : vector<2x128xf32>
    %145 = arith.negf %144 : vector<2x128xf32>
    %146 = math.exp %145 : vector<2x128xf32>
    %cst_32 = arith.constant 1.000000e+00 : f32
    %147 = vector.broadcast %cst_32 : f32 to vector<2x128xf32>
    %148 = arith.addf %147, %146 : vector<2x128xf32>
    %149 = arith.divf %147, %148 : vector<2x128xf32>
    %150 = math.tanh %144 : vector<2x128xf32>
    %151 = vector.extract_strided_slice %149 {offsets = [0, 0], sizes = [2, 32], strides = [1, 1]} : vector<2x128xf32> to vector<2x32xf32>
    %152 = vector.extract_strided_slice %149 {offsets = [0, 32], sizes = [2, 32], strides = [1, 1]} : vector<2x128xf32> to vector<2x32xf32>
    %153 = vector.extract_strided_slice %149 {offsets = [0, 96], sizes = [2, 32], strides = [1, 1]} : vector<2x128xf32> to vector<2x32xf32>
    %154 = vector.extract_strided_slice %150 {offsets = [0, 64], sizes = [2, 32], strides = [1, 1]} : vector<2x128xf32> to vector<2x32xf32>
    %155 = arith.mulf %152, %138 : vector<2x32xf32>
    %156 = arith.mulf %151, %154 : vector<2x32xf32>
    %157 = arith.addf %155, %156 : vector<2x32xf32>
    %158 = math.tanh %157 : vector<2x32xf32>
    %159 = arith.mulf %153, %158 : vector<2x32xf32>
    %c14 = arith.constant 14 : index
    %c0_33 = arith.constant 0 : index
    %160 = vector.load %arg11[%c14, %c0_33] : memref<16x32xf32, #tpu.memory_space<vmem>>, vector<2x32xf32>
    tpu.vector_store %arg11[%c14, %c0_33], %159 {strides = array<i32>} : memref<16x32xf32, #tpu.memory_space<vmem>>, vector<2x32xf32>,
    %c0_34 = arith.constant 0 : index
    %c0_35 = arith.constant 0 : index
    %161 = vector.load %arg11[%c0_34, %c0_35] : memref<16x32xf32, #tpu.memory_space<vmem>>, vector<16x32xf32>
    %c0_36 = arith.constant 0 : index
    %c0_37 = arith.constant 0 : index
    %162 = vector.load %arg4[%c0_36, %c0_37] : memref<32x16xf32, #tpu.memory_space<vmem>>, vector<32x16xf32>
    %cst_38 = arith.constant dense<0.000000e+00> : vector<16x16xf32>
    %163 = tpu.matmul %161, %162, %cst_38 {dimension_numbers = #tpu.dot_dimension_numbers<[1], [0], [0], [1], [0, 0, 1, 1], [], []>} : vector<16x32xf32>, vector<32x16xf32>, vector<16x16xf32> -> vector<16x16xf32>
    %c0_39 = arith.constant 0 : index
    %c0_40 = arith.constant 0 : index
    %164 = vector.load %arg5[%c0_39, %c0_40] : memref<1x16xf32, #tpu.memory_space<vmem>>, vector<1x16xf32>
    %165 = vector.broadcast %164 : vector<1x16xf32> to vector<16x16xf32>
    %166 = arith.addf %163, %165 : vector<16x16xf32>
    %cst_41 = arith.constant dense<0.000000e+00> : vector<16xf32>
    %167 = vector.multi_reduction <add>, %166, %cst_41 [0] : vector<16x16xf32> to vector<16xf32>
    %168 = vector.shape_cast %167 : vector<16xf32> to vector<1x16xf32>
    %cst_42 = arith.constant 1.600000e+01 : f32
    %169 = vector.broadcast %cst_42 : f32 to vector<1x16xf32>
    %170 = arith.divf %168, %169 : vector<1x16xf32>
    %171 = vector.broadcast %170 : vector<1x16xf32> to vector<16x16xf32>
    %172 = arith.subf %166, %171 : vector<16x16xf32>
    %173 = arith.mulf %172, %172 : vector<16x16xf32>
    %cst_43 = arith.constant dense<0.000000e+00> : vector<16xf32>
    %174 = vector.multi_reduction <add>, %173, %cst_43 [0] : vector<16x16xf32> to vector<16xf32>
    %175 = vector.shape_cast %174 : vector<16xf32> to vector<1x16xf32>
    %cst_44 = arith.constant 1.600000e+01 : f32
    %176 = vector.broadcast %cst_44 : f32 to vector<1x16xf32>
    %177 = arith.divf %175, %176 : vector<1x16xf32>
    %178 = vector.broadcast %170 : vector<1x16xf32> to vector<16x16xf32>
    %179 = arith.subf %166, %178 : vector<16x16xf32>
    %cst_45 = arith.constant 9.99999974E-6 : f32
    %180 = vector.broadcast %cst_45 : f32 to vector<1x16xf32>
    %181 = arith.addf %177, %180 : vector<1x16xf32>
    %182 = math.rsqrt %181 : vector<1x16xf32>
    %183 = vector.broadcast %182 : vector<1x16xf32> to vector<16x16xf32>
    %184 = arith.mulf %179, %183 : vector<16x16xf32>
    %c0_46 = arith.constant 0 : index
    %c0_47 = arith.constant 0 : index
    %185 = vector.load %arg6[%c0_46, %c0_47] : memref<1x16xf32, #tpu.memory_space<vmem>>, vector<1x16xf32>
    %186 = vector.broadcast %185 : vector<1x16xf32> to vector<16x16xf32>
    %187 = arith.mulf %184, %186 : vector<16x16xf32>
    %c0_48 = arith.constant 0 : index
    %c0_49 = arith.constant 0 : index
    %188 = vector.load %arg7[%c0_48, %c0_49] : memref<1x16xf32, #tpu.memory_space<vmem>>, vector<1x16xf32>
    %189 = vector.broadcast %188 : vector<1x16xf32> to vector<16x16xf32>
    %190 = arith.addf %187, %189 : vector<16x16xf32>
    %cst_50 = arith.constant 0.000000e+00 : f32
    %191 = vector.broadcast %cst_50 : f32 to vector<16x16xf32>
    %192 = arith.maximumf %190, %191 : vector<16x16xf32>
    %c0_51 = arith.constant 0 : index
    %c0_52 = arith.constant 0 : index
    %193 = vector.load %arg8[%c0_51, %c0_52] : memref<1x16xf32, #tpu.memory_space<vmem>>, vector<1x16xf32>
    %194 = vector.broadcast %193 : vector<1x16xf32> to vector<16x16xf32>
    %195 = arith.mulf %192, %194 : vector<16x16xf32>
    %cst_53 = arith.constant dense<0.000000e+00> : vector<16xf32>
    %196 = vector.multi_reduction <add>, %195, %cst_53 [1] : vector<16x16xf32> to vector<16xf32>
    %197 = vector.shape_cast %196 : vector<16xf32> to vector<16x1xf32>
    %c0_54 = arith.constant 0 : index
    %c0_55 = arith.constant 0 : index
    %198 = vector.load %arg9[%c0_54, %c0_55] : memref<1x1xf32, #tpu.memory_space<vmem>>, vector<1x1xf32>
    %199 = vector.broadcast %198 : vector<1x1xf32> to vector<16x1xf32>
    %200 = arith.addf %197, %199 : vector<16x1xf32>
    %201 = vector.shape_cast %200 : vector<16x1xf32> to vector<16x1xf32>
    %202 = vector.broadcast %201 : vector<16x1xf32> to vector<16x128xf32>
    %c0_56 = arith.constant 0 : index
    %c0_57 = arith.constant 0 : index
    %203 = vector.load %arg10[%c0_56, %c0_57] : memref<16x128xf32, #tpu.memory_space<vmem>>, vector<16x128xf32>
    tpu.vector_store %arg10[%c0_56, %c0_57], %202 {strides = array<i32>} : memref<16x128xf32, #tpu.memory_space<vmem>>, vector<16x128xf32>,
    return
  }
}

</mosaic_0001>

<llo_original>
// kernel: rnn_lstm_forward.1
$region0: #{rnn_lstm_forward.1}
  #allocation0 [shape = 'u32[]', space=smem, size = 0x4, offset = 0x4, fixed_abs, tag = 'smem constant byte address 0x4 - core index']
  #allocation1 [shape = 'u32[144,128]{1,0:T(1,128)}', space=vmem, size = 0x12000, scoped, tag = 'internal scratch']
  #allocation2 [shape = 'f32[16,32]{1,0:T(8,128)}', space=vmem, size = 0x2000, scoped, tag = 'scratch operand']
  #allocation3 [shape = 'f32[1,1]{1,0:T(1,128)S(1)}', space=vmem, size = 0x200, scoped, tag = 'scoped memory for rnn_lstm_forward.1']
  %s0 = inlined_call_operand.vmem [shape: f32[16,4], index: 0, kind: input, shape index: {}]
  %s1 = inlined_call_operand.vmem [shape: f32[4,128], index: 1, kind: input, shape index: {}]
  %s2 = inlined_call_operand.vmem [shape: f32[32,128], index: 2, kind: input, shape index: {}]
  %s3 = inlined_call_operand.vmem [shape: f32[1,128], index: 3, kind: input, shape index: {}]
  %s4 = inlined_call_operand.vmem [shape: f32[32,16], index: 4, kind: input, shape index: {}]
  %s5 = inlined_call_operand.vmem [shape: f32[1,16], index: 5, kind: input, shape index: {}]
  %s6 = inlined_call_operand.vmem [shape: f32[1,16], index: 6, kind: input, shape index: {}]
  %s7 = inlined_call_operand.vmem [shape: f32[1,16], index: 7, kind: input, shape index: {}]
  %s8 = inlined_call_operand.vmem [shape: f32[1,16], index: 8, kind: input, shape index: {}]
  %s9 = inlined_call_operand.<no memory space> [shape: f32[1,1], index: 9, kind: input, shape index: {}]
  %s10 = inlined_call_operand.vmem [shape: f32[16,128], index: 10, kind: output, shape index: {}]
  %s11 = sld [smem:[#allocation0]]
  $region50: #{rnn_lstm_forward.1} parent=0
    _
  %s13 = ssub.s32 1, %s11
  %s14 = scalar_select 0, %s13, %s11
  %v15 = vstv %s9
  %16 = vst [vmem:[#allocation3] sm:$0x1] %v15
  // Predicated region
  $region2: #{rnn_lstm_forward.1} parent=0 // pred_check
    _
  $region3: #{rnn_lstm_forward.1} parent=0 // pred_check_branch
    %18 = sbr.rel (0) target = $region5
  $region4: #{rnn_lstm_forward.1} parent=0 // pred_region
    _
  $region5: #{rnn_lstm_forward.1} parent=0 // pred_fallthru
    _
  // Predicated region
  $region6: #{rnn_lstm_forward.1} parent=0 // pred_check
    _
  $region7: #{rnn_lstm_forward.1} parent=0 // pred_check_branch
    %20 = sbr.rel (0) target = $region9
  $region8: #{rnn_lstm_forward.1} parent=0 // pred_region
    _
  $region9: #{rnn_lstm_forward.1} parent=0 // pred_fallthru
    _
  // Predicated region
  $region10: #{rnn_lstm_forward.1} parent=0 // pred_check
    _
  $region11: #{rnn_lstm_forward.1} parent=0 // pred_check_branch
    %22 = sbr.rel (0) target = $region13
  $region12: #{rnn_lstm_forward.1} parent=0 // pred_region
    _
  $region13: #{rnn_lstm_forward.1} parent=0 // pred_fallthru
    _
  // Predicated region
  $region14: #{rnn_lstm_forward.1} parent=0 // pred_check
    _
  $region15: #{rnn_lstm_forward.1} parent=0 // pred_check_branch
    %24 = sbr.rel (0) target = $region17
  $region16: #{rnn_lstm_forward.1} parent=0 // pred_region
    _
  $region17: #{rnn_lstm_forward.1} parent=0 // pred_fallthru
    _
  // Predicated region
  $region18: #{rnn_lstm_forward.1} parent=0 // pred_check
    _
  $region19: #{rnn_lstm_forward.1} parent=0 // pred_check_branch
    %26 = sbr.rel (0) target = $region21
  $region20: #{rnn_lstm_forward.1} parent=0 // pred_region
    _
  $region21: #{rnn_lstm_forward.1} parent=0 // pred_fallthru
    _
  // Predicated region
  $region22: #{rnn_lstm_forward.1} parent=0 // pred_check
    _
  $region23: #{rnn_lstm_forward.1} parent=0 // pred_check_branch
    %28 = sbr.rel (0) target = $region25
  $region24: #{rnn_lstm_forward.1} parent=0 // pred_region
    _
  $region25: #{rnn_lstm_forward.1} parent=0 // pred_fallthru
    _
  // Predicated region
  $region26: #{rnn_lstm_forward.1} parent=0 // pred_check
    _
  $region27: #{rnn_lstm_forward.1} parent=0 // pred_check_branch
    %30 = sbr.rel (0) target = $region29
  $region28: #{rnn_lstm_forward.1} parent=0 // pred_region
    _
  $region29: #{rnn_lstm_forward.1} parent=0 // pred_fallthru
    _
  // Predicated region
  $region30: #{rnn_lstm_forward.1} parent=0 // pred_check
    _
  $region31: #{rnn_lstm_forward.1} parent=0 // pred_check_branch
    %32 = sbr.rel (0) target = $region33
  $region32: #{rnn_lstm_forward.1} parent=0 // pred_region
    _
  $region33: #{rnn_lstm_forward.1} parent=0 // pred_fallthru
    _
  // Predicated region
  $region34: #{rnn_lstm_forward.1} parent=0 // pred_check
    _
  $region35: #{rnn_lstm_forward.1} parent=0 // pred_check_branch
    %34 = sbr.rel (0) target = $region37
  $region36: #{rnn_lstm_forward.1} parent=0 // pred_region
    _
  $region37: #{rnn_lstm_forward.1} parent=0 // pred_fallthru
    _
  // Predicated region
  $region38: #{rnn_lstm_forward.1} parent=0 // pred_check
    _
  $region39: #{rnn_lstm_forward.1} parent=0 // pred_check_branch
    %36 = sbr.rel (0) target = $region41
  $region40: #{rnn_lstm_forward.1} parent=0 // pred_region
    _
  $region41: #{rnn_lstm_forward.1} parent=0 // pred_fallthru
    _
  %v37 = vld [vmem:[%s0] sm:$0xff]
  %v38 = vld [vmem:[%s0 + $0x8] sm:$0xff]
  %v39 = vld [vmem:[%s1] sm:$0xf]
  %v40 = vld [vmem:[%s3] sm:$0x1]
  %v42 = vlaneseq
  %v43 = vshrl.u32 %v42, 7
  %v44 = vsub.s32 0, %v43
  %v45 = vrot.slane %v40, %v44
  %vm47 = vcmask 31744
  %v49 = vsel %vm47, %v37, 0
  %v52 = vsel %vm47, %v38, 0
  %vm54 = vcmask 1043456
  %v56 = vsel %vm54, %v39, 0
  %58 = vmatprep.subr.mxu0 0.0
  %59 = vmatpush1.msra.mxu0 0.0
  %60 = vmatprep.subr.mxu0 0.0
  %61 = vmatpush1.msra.mxu0 0.0
  %62 = vmatprep.subr.mxu0 0.0
  %63 = vmatpush1.msra.mxu0 0.0
  %64 = vmatprep.subr.mxu0 0.0
  %65 = vmatpush1.msra.mxu0 0.0
  %66 = vmatprep.subr.mxu0 0.0
  %67 = vmatpush1.msra.mxu0 0.0
  %68 = vmatprep.subr.mxu0 0.0
  %69 = vmatpush1.msra.mxu0 0.0
  %70 = vmatprep.subr.mxu0 0.0
  %71 = vmatpush1.msra.mxu0 0.0
  %72 = vmatprep.subr.mxu0 0.0
  %73 = vmatpush1.msra.mxu0 0.0
  %74 = vmatprep.subr.mxu0 0.0
  %75 = vmatpush1.msra.mxu0 0.0
  %76 = vmatprep.subr.mxu0 0.0
  %77 = vmatpush1.msra.mxu0 0.0
  %78 = vmatprep.subr.mxu0 0.0
  %79 = vmatpush1.msra.mxu0 0.0
  %80 = vmatprep.subr.mxu0 0.0
  %81 = vmatpush1.msra.mxu0 0.0
  %82 = vmatprep.subr.mxu0 0.0
  %83 = vmatpush1.msra.mxu0 0.0
  %84 = vmatprep.subr.mxu0 0.0
  %85 = vmatpush1.msra.mxu0 0.0
  %86 = vmatprep.subr.mxu0 0.0
  %87 = vmatpush1.msra.mxu0 0.0
  %88 = vmatprep.subr.mxu0 0.0
  %89 = vmatpush1.msra.mxu0 %v56
  %90 = vmatprep.subr.mxu0 0.0
  %91 = vmatpush2.msra.mxu0 0.0
  %92 = vmatprep.subr.mxu0 0.0
  %93 = vmatpush2.msra.mxu0 0.0
  %94 = vmatprep.subr.mxu0 0.0
  %95 = vmatpush2.msra.mxu0 0.0
  %96 = vmatprep.subr.mxu0 0.0
  %97 = vmatpush2.msra.mxu0 0.0
  %98 = vmatprep.subr.mxu0 0.0
  %99 = vmatpush2.msra.mxu0 0.0
  %100 = vmatprep.subr.mxu0 0.0
  %101 = vmatpush2.msra.mxu0 0.0
  %102 = vmatprep.subr.mxu0 0.0
  %103 = vmatpush2.msra.mxu0 0.0
  %104 = vmatprep.subr.mxu0 0.0
  %105 = vmatpush2.msra.mxu0 0.0
  %106 = vmatprep.subr.mxu0 0.0
  %107 = vmatpush2.msra.mxu0 0.0
  %108 = vmatprep.subr.mxu0 0.0
  %109 = vmatpush2.msra.mxu0 0.0
  %110 = vmatprep.subr.mxu0 0.0
  %111 = vmatpush2.msra.mxu0 0.0
  %112 = vmatprep.subr.mxu0 0.0
  %113 = vmatpush2.msra.mxu0 0.0
  %114 = vmatprep.subr.mxu0 0.0
  %115 = vmatpush2.msra.mxu0 0.0
  %116 = vmatprep.subr.mxu0 0.0
  %117 = vmatpush2.msra.mxu0 0.0
  %118 = vmatprep.subr.mxu0 0.0
  %119 = vmatpush2.msra.mxu0 0.0
  %120 = vmatprep.subr.mxu0 0.0
  %121 = vmatpush2.msra.mxu0 0.0
  %122 = vmatprep.mubr.f32.mxu0 0.0
  %123 = vmatmul.mubr.f32.gmra.mxu0 %v49
  %v124 = vpop.f32.mrf.mxu0
  %v125 = vadd.f32 %v45, %v124
  %v126 = vpop.f32.mrf.mxu0
  %127 = vmatprep.mubr.f32.mxu0 0.0
  %128 = vmatmul.mubr.f32.gmra.mxu0 %v52
  %v129 = vpop.f32.mrf.mxu0
  %v130 = vadd.f32 %v45, %v129
  %v131 = vpop.f32.mrf.mxu0
  %132 = vdwg.mxu0
  %v133 = vld [vmem:[%s2] sm:$0xff]
  %v134 = vld [vmem:[%s2 + $0x8] sm:$0xff]
  %v135 = vld [vmem:[%s2 + $0x10] sm:$0xff]
  %v136 = vld [vmem:[%s2 + $0x18] sm:$0xff]
  %vm137 = vcmask 261120
  %v139 = vsel %vm137, 0.0, 0
  %141 = vmatprep.subr.mxu0 0.0
  %142 = vmatpush1.msra.mxu0 0.0
  %143 = vmatprep.subr.mxu0 0.0
  %144 = vmatpush1.msra.mxu0 0.0
  %145 = vmatprep.subr.mxu0 0.0
  %146 = vmatpush1.msra.mxu0 0.0
  %147 = vmatprep.subr.mxu0 0.0
  %148 = vmatpush1.msra.mxu0 0.0
  %149 = vmatprep.subr.mxu0 0.0
  %150 = vmatpush1.msra.mxu0 0.0
  %151 = vmatprep.subr.mxu0 0.0
  %152 = vmatpush1.msra.mxu0 0.0
  %153 = vmatprep.subr.mxu0 0.0
  %154 = vmatpush1.msra.mxu0 0.0
  %155 = vmatprep.subr.mxu0 0.0
  %156 = vmatpush1.msra.mxu0 0.0
  %157 = vmatprep.subr.mxu0 0.0
  %158 = vmatpush1.msra.mxu0 0.0
  %159 = vmatprep.subr.mxu0 0.0
  %160 = vmatpush1.msra.mxu0 0.0
  %161 = vmatprep.subr.mxu0 0.0
  %162 = vmatpush1.msra.mxu0 0.0
  %163 = vmatprep.subr.mxu0 0.0
  %164 = vmatpush1.msra.mxu0 0.0
  %165 = vmatprep.subr.mxu0 0.0
  %166 = vmatpush1.msra.mxu0 %v136
  %167 = vmatprep.subr.mxu0 0.0
  %168 = vmatpush1.msra.mxu0 %v135
  %169 = vmatprep.subr.mxu0 0.0
  %170 = vmatpush1.msra.mxu0 %v134
  %171 = vmatprep.subr.mxu0 0.0
  %172 = vmatpush1.msra.mxu0 %v133
  %173 = vmatprep.subr.mxu0 0.0
  %174 = vmatpush2.msra.mxu0 0.0
  %175 = vmatprep.subr.mxu0 0.0
  %176 = vmatpush2.msra.mxu0 0.0
  %177 = vmatprep.subr.mxu0 0.0
  %178 = vmatpush2.msra.mxu0 0.0
  %179 = vmatprep.subr.mxu0 0.0
  %180 = vmatpush2.msra.mxu0 0.0
  %181 = vmatprep.subr.mxu0 0.0
  %182 = vmatpush2.msra.mxu0 0.0
  %183 = vmatprep.subr.mxu0 0.0
  %184 = vmatpush2.msra.mxu0 0.0
  %185 = vmatprep.subr.mxu0 0.0
  %186 = vmatpush2.msra.mxu0 0.0
  %187 = vmatprep.subr.mxu0 0.0
  %188 = vmatpush2.msra.mxu0 0.0
  %189 = vmatprep.subr.mxu0 0.0
  %190 = vmatpush2.msra.mxu0 0.0
  %191 = vmatprep.subr.mxu0 0.0
  %192 = vmatpush2.msra.mxu0 0.0
  %193 = vmatprep.subr.mxu0 0.0
  %194 = vmatpush2.msra.mxu0 0.0
  %195 = vmatprep.subr.mxu0 0.0
  %196 = vmatpush2.msra.mxu0 0.0
  %197 = vmatprep.subr.mxu0 0.0
  %198 = vmatpush2.msra.mxu0 0.0
  %199 = vmatprep.subr.mxu0 0.0
  %200 = vmatpush2.msra.mxu0 0.0
  %201 = vmatprep.subr.mxu0 0.0
  %202 = vmatpush2.msra.mxu0 0.0
  %203 = vmatprep.subr.mxu0 0.0
  %204 = vmatpush2.msra.mxu0 0.0
  %205 = vmatprep.mubr.f32.mxu0 0.0
  %206 = vmatmul.mubr.f32.gmra.mxu0 %v139
  %v207 = vpop.f32.mrf.mxu0
  %v208 = vadd.f32 0.0, %v207
  %v209 = vpop.f32.mrf.mxu0
  %210 = vdwg.mxu0
  %v211 = vadd.f32 %v125, %v208
  %v212 = vxor.u32 %v211, 2147483648
  %v213 = vmul.f32 %v212, 1.442695
  %v214 = vpow.pop %v213
  %v215 = vadd.f32 %v214, 1.0
  %v216 = vrcp.pop %v215
  %v217 = vmul.f32 1.0, %v216
  %v218 = vtanh.pop %v211
  %v219 = vmul.f32 %v217, 0.0
  %221 = vrot.lane.b32.xlu0 %v218, 64
  %v222 = vpop.permute.xlu0 %221
  %v224 = vmul.f32 %v217, %v222
  %226 = vrot.lane.b32.xlu0 %v224, 32
  %v227 = vpop.permute.xlu0 %226
  %v229 = vadd.f32 %v219, %v227
  %v230 = vtanh.pop %v229
  %232 = vrot.lane.b32.xlu0 %v230, 64
  %v233 = vpop.permute.xlu0 %232
  %v235 = vmul.f32 %v217, %v233
  %237 = vrot.lane.b32.xlu0 %v235, 32
  %v238 = vpop.permute.xlu0 %237
  %vm240 = vcmask 254976
  %241 = vst.msk [vmem:[#allocation2] sm:$0x3] %vm240, %v238
  %v242 = vsel %vm137, %v238, 0
  %244 = vmatprep.subr.mxu0 0.0
  %245 = vmatpush1.msra.mxu0 0.0
  %246 = vmatprep.subr.mxu0 0.0
  %247 = vmatpush1.msra.mxu0 0.0
  %248 = vmatprep.subr.mxu0 0.0
  %249 = vmatpush1.msra.mxu0 0.0
  %250 = vmatprep.subr.mxu0 0.0
  %251 = vmatpush1.msra.mxu0 0.0
  %252 = vmatprep.subr.mxu0 0.0
  %253 = vmatpush1.msra.mxu0 0.0
  %254 = vmatprep.subr.mxu0 0.0
  %255 = vmatpush1.msra.mxu0 0.0
  %256 = vmatprep.subr.mxu0 0.0
  %257 = vmatpush1.msra.mxu0 0.0
  %258 = vmatprep.subr.mxu0 0.0
  %259 = vmatpush1.msra.mxu0 0.0
  %260 = vmatprep.subr.mxu0 0.0
  %261 = vmatpush1.msra.mxu0 0.0
  %262 = vmatprep.subr.mxu0 0.0
  %263 = vmatpush1.msra.mxu0 0.0
  %264 = vmatprep.subr.mxu0 0.0
  %265 = vmatpush1.msra.mxu0 0.0
  %266 = vmatprep.subr.mxu0 0.0
  %267 = vmatpush1.msra.mxu0 0.0
  %268 = vmatprep.subr.mxu0 0.0
  %269 = vmatpush1.msra.mxu0 %v136
  %270 = vmatprep.subr.mxu0 0.0
  %271 = vmatpush1.msra.mxu0 %v135
  %272 = vmatprep.subr.mxu0 0.0
  %273 = vmatpush1.msra.mxu0 %v134
  %274 = vmatprep.subr.mxu0 0.0
  %275 = vmatpush1.msra.mxu0 %v133
  %276 = vmatprep.subr.mxu0 0.0
  %277 = vmatpush2.msra.mxu0 0.0
  %278 = vmatprep.subr.mxu0 0.0
  %279 = vmatpush2.msra.mxu0 0.0
  %280 = vmatprep.subr.mxu0 0.0
  %281 = vmatpush2.msra.mxu0 0.0
  %282 = vmatprep.subr.mxu0 0.0
  %283 = vmatpush2.msra.mxu0 0.0
  %284 = vmatprep.subr.mxu0 0.0
  %285 = vmatpush2.msra.mxu0 0.0
  %286 = vmatprep.subr.mxu0 0.0
  %287 = vmatpush2.msra.mxu0 0.0
  %288 = vmatprep.subr.mxu0 0.0
  %289 = vmatpush2.msra.mxu0 0.0
  %290 = vmatprep.subr.mxu0 0.0
  %291 = vmatpush2.msra.mxu0 0.0
  %292 = vmatprep.subr.mxu0 0.0
  %293 = vmatpush2.msra.mxu0 0.0
  %294 = vmatprep.subr.mxu0 0.0
  %295 = vmatpush2.msra.mxu0 0.0
  %296 = vmatprep.subr.mxu0 0.0
  %297 = vmatpush2.msra.mxu0 0.0
  %298 = vmatprep.subr.mxu0 0.0
  %299 = vmatpush2.msra.mxu0 0.0
  %300 = vmatprep.subr.mxu0 0.0
  %301 = vmatpush2.msra.mxu0 0.0
  %302 = vmatprep.subr.mxu0 0.0
  %303 = vmatpush2.msra.mxu0 0.0
  %304 = vmatprep.subr.mxu0 0.0
  %305 = vmatpush2.msra.mxu0 0.0
  %306 = vmatprep.subr.mxu0 0.0
  %307 = vmatpush2.msra.mxu0 0.0
  %308 = vmatprep.mubr.f32.mxu0 0.0
  %309 = vmatmul.mubr.f32.gmra.mxu0 %v242
  %v310 = vpop.f32.mrf.mxu0
  %v311 = vadd.f32 0.0, %v310
  %v312 = vpop.f32.mrf.mxu0
  %313 = vdwg.mxu0
  %v315 = vrot.slane %v311, 6
  %v317 = vadd.f32 %v125, %v315
  %v318 = vxor.u32 %v317, 2147483648
  %v319 = vmul.f32 %v318, 1.442695
  %v320 = vpow.pop %v319
  %v321 = vadd.f32 %v320, 1.0
  %v322 = vrcp.pop %v321
  %v323 = vmul.f32 1.0, %v322
  %v324 = vtanh.pop %v317
  %v326 = vrot.slane %v229, 6
  %v328 = vmul.f32 %v323, %v326
  %330 = vrot.lane.b32.xlu0 %v324, 64
  %v331 = vpop.permute.xlu0 %330
  %v333 = vmul.f32 %v323, %v331
  %335 = vrot.lane.b32.xlu0 %v333, 32
  %v336 = vpop.permute.xlu0 %335
  %v338 = vadd.f32 %v328, %v336
  %v339 = vtanh.pop %v338
  %341 = vrot.lane.b32.xlu0 %v339, 64
  %v342 = vpop.permute.xlu0 %341
  %v344 = vmul.f32 %v323, %v342
  %346 = vrot.lane.b32.xlu0 %v344, 32
  %v347 = vpop.permute.xlu0 %346
  %vm349 = vcmask 257026
  %350 = vst.msk [vmem:[#allocation2] sm:$0xc] %vm349, %v347
  %v351 = vrot.slane %v344, 2
  %352 = vrot.lane.b32.xlu0 %v351, 32
  %v353 = vpop.permute.xlu0 %352
  %v354 = vsel %vm137, %v353, 0
  %356 = vmatprep.subr.mxu0 0.0
  %357 = vmatpush1.msra.mxu0 0.0
  %358 = vmatprep.subr.mxu0 0.0
  %359 = vmatpush1.msra.mxu0 0.0
  %360 = vmatprep.subr.mxu0 0.0
  %361 = vmatpush1.msra.mxu0 0.0
  %362 = vmatprep.subr.mxu0 0.0
  %363 = vmatpush1.msra.mxu0 0.0
  %364 = vmatprep.subr.mxu0 0.0
  %365 = vmatpush1.msra.mxu0 0.0
  %366 = vmatprep.subr.mxu0 0.0
  %367 = vmatpush1.msra.mxu0 0.0
  %368 = vmatprep.subr.mxu0 0.0
  %369 = vmatpush1.msra.mxu0 0.0
  %370 = vmatprep.subr.mxu0 0.0
  %371 = vmatpush1.msra.mxu0 0.0
  %372 = vmatprep.subr.mxu0 0.0
  %373 = vmatpush1.msra.mxu0 0.0
  %374 = vmatprep.subr.mxu0 0.0
  %375 = vmatpush1.msra.mxu0 0.0
  %376 = vmatprep.subr.mxu0 0.0
  %377 = vmatpush1.msra.mxu0 0.0
  %378 = vmatprep.subr.mxu0 0.0
  %379 = vmatpush1.msra.mxu0 0.0
  %380 = vmatprep.subr.mxu0 0.0
  %381 = vmatpush1.msra.mxu0 %v136
  %382 = vmatprep.subr.mxu0 0.0
  %383 = vmatpush1.msra.mxu0 %v135
  %384 = vmatprep.subr.mxu0 0.0
  %385 = vmatpush1.msra.mxu0 %v134
  %386 = vmatprep.subr.mxu0 0.0
  %387 = vmatpush1.msra.mxu0 %v133
  %388 = vmatprep.subr.mxu0 0.0
  %389 = vmatpush2.msra.mxu0 0.0
  %390 = vmatprep.subr.mxu0 0.0
  %391 = vmatpush2.msra.mxu0 0.0
  %392 = vmatprep.subr.mxu0 0.0
  %393 = vmatpush2.msra.mxu0 0.0
  %394 = vmatprep.subr.mxu0 0.0
  %395 = vmatpush2.msra.mxu0 0.0
  %396 = vmatprep.subr.mxu0 0.0
  %397 = vmatpush2.msra.mxu0 0.0
  %398 = vmatprep.subr.mxu0 0.0
  %399 = vmatpush2.msra.mxu0 0.0
  %400 = vmatprep.subr.mxu0 0.0
  %401 = vmatpush2.msra.mxu0 0.0
  %402 = vmatprep.subr.mxu0 0.0
  %403 = vmatpush2.msra.mxu0 0.0
  %404 = vmatprep.subr.mxu0 0.0
  %405 = vmatpush2.msra.mxu0 0.0
  %406 = vmatprep.subr.mxu0 0.0
  %407 = vmatpush2.msra.mxu0 0.0
  %408 = vmatprep.subr.mxu0 0.0
  %409 = vmatpush2.msra.mxu0 0.0
  %410 = vmatprep.subr.mxu0 0.0
  %411 = vmatpush2.msra.mxu0 0.0
  %412 = vmatprep.subr.mxu0 0.0
  %413 = vmatpush2.msra.mxu0 0.0
  %414 = vmatprep.subr.mxu0 0.0
  %415 = vmatpush2.msra.mxu0 0.0
  %416 = vmatprep.subr.mxu0 0.0
  %417 = vmatpush2.msra.mxu0 0.0
  %418 = vmatprep.subr.mxu0 0.0
  %419 = vmatpush2.msra.mxu0 0.0
  %420 = vmatprep.mubr.f32.mxu0 0.0
  %421 = vmatmul.mubr.f32.gmra.mxu0 %v354
  %v422 = vpop.f32.mrf.mxu0
  %v423 = vadd.f32 0.0, %v422
  %v424 = vpop.f32.mrf.mxu0
  %425 = vdwg.mxu0
  %v427 = vrot.slane %v423, 4
  %v429 = vadd.f32 %v125, %v427
  %v430 = vxor.u32 %v429, 2147483648
  %v431 = vmul.f32 %v430, 1.442695
  %v432 = vpow.pop %v431
  %v433 = vadd.f32 %v432, 1.0
  %v434 = vrcp.pop %v433
  %v435 = vmul.f32 1.0, %v434
  %v436 = vtanh.pop %v429
  %v438 = vrot.slane %v338, 6
  %v440 = vmul.f32 %v435, %v438
  %442 = vrot.lane.b32.xlu0 %v436, 64
  %v443 = vpop.permute.xlu0 %442
  %v445 = vmul.f32 %v435, %v443
  %447 = vrot.lane.b32.xlu0 %v445, 32
  %v448 = vpop.permute.xlu0 %447
  %v450 = vadd.f32 %v440, %v448
  %v451 = vtanh.pop %v450
  %453 = vrot.lane.b32.xlu0 %v451, 64
  %v454 = vpop.permute.xlu0 %453
  %v456 = vmul.f32 %v435, %v454
  %458 = vrot.lane.b32.xlu0 %v456, 32
  %v459 = vpop.permute.xlu0 %458
  %vm461 = vcmask 259076
  %462 = vst.msk [vmem:[#allocation2] sm:$0x30] %vm461, %v459
  %v463 = vrot.slane %v456, 4
  %464 = vrot.lane.b32.xlu0 %v463, 32
  %v465 = vpop.permute.xlu0 %464
  %v466 = vsel %vm137, %v465, 0
  %468 = vmatprep.subr.mxu0 0.0
  %469 = vmatpush1.msra.mxu0 0.0
  %470 = vmatprep.subr.mxu0 0.0
  %471 = vmatpush1.msra.mxu0 0.0
  %472 = vmatprep.subr.mxu0 0.0
  %473 = vmatpush1.msra.mxu0 0.0
  %474 = vmatprep.subr.mxu0 0.0
  %475 = vmatpush1.msra.mxu0 0.0
  %476 = vmatprep.subr.mxu0 0.0
  %477 = vmatpush1.msra.mxu0 0.0
  %478 = vmatprep.subr.mxu0 0.0
  %479 = vmatpush1.msra.mxu0 0.0
  %480 = vmatprep.subr.mxu0 0.0
  %481 = vmatpush1.msra.mxu0 0.0
  %482 = vmatprep.subr.mxu0 0.0
  %483 = vmatpush1.msra.mxu0 0.0
  %484 = vmatprep.subr.mxu0 0.0
  %485 = vmatpush1.msra.mxu0 0.0
  %486 = vmatprep.subr.mxu0 0.0
  %487 = vmatpush1.msra.mxu0 0.0
  %488 = vmatprep.subr.mxu0 0.0
  %489 = vmatpush1.msra.mxu0 0.0
  %490 = vmatprep.subr.mxu0 0.0
  %491 = vmatpush1.msra.mxu0 0.0
  %492 = vmatprep.subr.mxu0 0.0
  %493 = vmatpush1.msra.mxu0 %v136
  %494 = vmatprep.subr.mxu0 0.0
  %495 = vmatpush1.msra.mxu0 %v135
  %496 = vmatprep.subr.mxu0 0.0
  %497 = vmatpush1.msra.mxu0 %v134
  %498 = vmatprep.subr.mxu0 0.0
  %499 = vmatpush1.msra.mxu0 %v133
  %500 = vmatprep.subr.mxu0 0.0
  %501 = vmatpush2.msra.mxu0 0.0
  %502 = vmatprep.subr.mxu0 0.0
  %503 = vmatpush2.msra.mxu0 0.0
  %504 = vmatprep.subr.mxu0 0.0
  %505 = vmatpush2.msra.mxu0 0.0
  %506 = vmatprep.subr.mxu0 0.0
  %507 = vmatpush2.msra.mxu0 0.0
  %508 = vmatprep.subr.mxu0 0.0
  %509 = vmatpush2.msra.mxu0 0.0
  %510 = vmatprep.subr.mxu0 0.0
  %511 = vmatpush2.msra.mxu0 0.0
  %512 = vmatprep.subr.mxu0 0.0
  %513 = vmatpush2.msra.mxu0 0.0
  %514 = vmatprep.subr.mxu0 0.0
  %515 = vmatpush2.msra.mxu0 0.0
  %516 = vmatprep.subr.mxu0 0.0
  %517 = vmatpush2.msra.mxu0 0.0
  %518 = vmatprep.subr.mxu0 0.0
  %519 = vmatpush2.msra.mxu0 0.0
  %520 = vmatprep.subr.mxu0 0.0
  %521 = vmatpush2.msra.mxu0 0.0
  %522 = vmatprep.subr.mxu0 0.0
  %523 = vmatpush2.msra.mxu0 0.0
  %524 = vmatprep.subr.mxu0 0.0
  %525 = vmatpush2.msra.mxu0 0.0
  %526 = vmatprep.subr.mxu0 0.0
  %527 = vmatpush2.msra.mxu0 0.0
  %528 = vmatprep.subr.mxu0 0.0
  %529 = vmatpush2.msra.mxu0 0.0
  %530 = vmatprep.subr.mxu0 0.0
  %531 = vmatpush2.msra.mxu0 0.0
  %532 = vmatprep.mubr.f32.mxu0 0.0
  %533 = vmatmul.mubr.f32.gmra.mxu0 %v466
  %v534 = vpop.f32.mrf.mxu0
  %v535 = vadd.f32 0.0, %v534
  %v536 = vpop.f32.mrf.mxu0
  %537 = vdwg.mxu0
  %v539 = vrot.slane %v535, 2
  %v541 = vadd.f32 %v125, %v539
  %v542 = vxor.u32 %v541, 2147483648
  %v543 = vmul.f32 %v542, 1.442695
  %v544 = vpow.pop %v543
  %v545 = vadd.f32 %v544, 1.0
  %v546 = vrcp.pop %v545
  %v547 = vmul.f32 1.0, %v546
  %v548 = vtanh.pop %v541
  %v550 = vrot.slane %v450, 6
  %v552 = vmul.f32 %v547, %v550
  %554 = vrot.lane.b32.xlu0 %v548, 64
  %v555 = vpop.permute.xlu0 %554
  %v557 = vmul.f32 %v547, %v555
  %559 = vrot.lane.b32.xlu0 %v557, 32
  %v560 = vpop.permute.xlu0 %559
  %v562 = vadd.f32 %v552, %v560
  %v563 = vtanh.pop %v562
  %565 = vrot.lane.b32.xlu0 %v563, 64
  %v566 = vpop.permute.xlu0 %565
  %v568 = vmul.f32 %v547, %v566
  %570 = vrot.lane.b32.xlu0 %v568, 32
  %v571 = vpop.permute.xlu0 %570
  %vm573 = vcmask 261126
  %574 = vst.msk [vmem:[#allocation2] sm:$0xc0] %vm573, %v571
  %v575 = vrot.slane %v568, 6
  %576 = vrot.lane.b32.xlu0 %v575, 32
  %v577 = vpop.permute.xlu0 %576
  %v578 = vsel %vm137, %v577, 0
  %580 = vmatprep.subr.mxu0 0.0
  %581 = vmatpush1.msra.mxu0 0.0
  %582 = vmatprep.subr.mxu0 0.0
  %583 = vmatpush1.msra.mxu0 0.0
  %584 = vmatprep.subr.mxu0 0.0
  %585 = vmatpush1.msra.mxu0 0.0
  %586 = vmatprep.subr.mxu0 0.0
  %587 = vmatpush1.msra.mxu0 0.0
  %588 = vmatprep.subr.mxu0 0.0
  %589 = vmatpush1.msra.mxu0 0.0
  %590 = vmatprep.subr.mxu0 0.0
  %591 = vmatpush1.msra.mxu0 0.0
  %592 = vmatprep.subr.mxu0 0.0
  %593 = vmatpush1.msra.mxu0 0.0
  %594 = vmatprep.subr.mxu0 0.0
  %595 = vmatpush1.msra.mxu0 0.0
  %596 = vmatprep.subr.mxu0 0.0
  %597 = vmatpush1.msra.mxu0 0.0
  %598 = vmatprep.subr.mxu0 0.0
  %599 = vmatpush1.msra.mxu0 0.0
  %600 = vmatprep.subr.mxu0 0.0
  %601 = vmatpush1.msra.mxu0 0.0
  %602 = vmatprep.subr.mxu0 0.0
  %603 = vmatpush1.msra.mxu0 0.0
  %604 = vmatprep.subr.mxu0 0.0
  %605 = vmatpush1.msra.mxu0 %v136
  %606 = vmatprep.subr.mxu0 0.0
  %607 = vmatpush1.msra.mxu0 %v135
  %608 = vmatprep.subr.mxu0 0.0
  %609 = vmatpush1.msra.mxu0 %v134
  %610 = vmatprep.subr.mxu0 0.0
  %611 = vmatpush1.msra.mxu0 %v133
  %612 = vmatprep.subr.mxu0 0.0
  %613 = vmatpush2.msra.mxu0 0.0
  %614 = vmatprep.subr.mxu0 0.0
  %615 = vmatpush2.msra.mxu0 0.0
  %616 = vmatprep.subr.mxu0 0.0
  %617 = vmatpush2.msra.mxu0 0.0
  %618 = vmatprep.subr.mxu0 0.0
  %619 = vmatpush2.msra.mxu0 0.0
  %620 = vmatprep.subr.mxu0 0.0
  %621 = vmatpush2.msra.mxu0 0.0
  %622 = vmatprep.subr.mxu0 0.0
  %623 = vmatpush2.msra.mxu0 0.0
  %624 = vmatprep.subr.mxu0 0.0
  %625 = vmatpush2.msra.mxu0 0.0
  %626 = vmatprep.subr.mxu0 0.0
  %627 = vmatpush2.msra.mxu0 0.0
  %628 = vmatprep.subr.mxu0 0.0
  %629 = vmatpush2.msra.mxu0 0.0
  %630 = vmatprep.subr.mxu0 0.0
  %631 = vmatpush2.msra.mxu0 0.0
  %632 = vmatprep.subr.mxu0 0.0
  %633 = vmatpush2.msra.mxu0 0.0
  %634 = vmatprep.subr.mxu0 0.0
  %635 = vmatpush2.msra.mxu0 0.0
  %636 = vmatprep.subr.mxu0 0.0
  %637 = vmatpush2.msra.mxu0 0.0
  %638 = vmatprep.subr.mxu0 0.0
  %639 = vmatpush2.msra.mxu0 0.0
  %640 = vmatprep.subr.mxu0 0.0
  %641 = vmatpush2.msra.mxu0 0.0
  %642 = vmatprep.subr.mxu0 0.0
  %643 = vmatpush2.msra.mxu0 0.0
  %644 = vmatprep.mubr.f32.mxu0 0.0
  %645 = vmatmul.mubr.f32.gmra.mxu0 %v578
  %v646 = vpop.f32.mrf.mxu0
  %v647 = vadd.f32 0.0, %v646
  %v648 = vpop.f32.mrf.mxu0
  %649 = vdwg.mxu0
  %v650 = vadd.f32 %v130, %v647
  %v651 = vxor.u32 %v650, 2147483648
  %v652 = vmul.f32 %v651, 1.442695
  %v653 = vpow.pop %v652
  %v654 = vadd.f32 %v653, 1.0
  %v655 = vrcp.pop %v654
  %v656 = vmul.f32 1.0, %v655
  %v657 = vtanh.pop %v650
  %v659 = vrot.slane %v562, 6
  %v661 = vmul.f32 %v656, %v659
  %663 = vrot.lane.b32.xlu0 %v657, 64
  %v664 = vpop.permute.xlu0 %663
  %v666 = vmul.f32 %v656, %v664
  %668 = vrot.lane.b32.xlu0 %v666, 32
  %v669 = vpop.permute.xlu0 %668
  %v671 = vadd.f32 %v661, %v669
  %v672 = vtanh.pop %v671
  %674 = vrot.lane.b32.xlu0 %v672, 64
  %v675 = vpop.permute.xlu0 %674
  %v677 = vmul.f32 %v656, %v675
  %679 = vrot.lane.b32.xlu0 %v677, 32
  %v680 = vpop.permute.xlu0 %679
  %682 = vst.msk [vmem:[#allocation2 + $0x8] sm:$0x3] %vm240, %v680
  %v683 = vsel %vm137, %v680, 0
  %685 = vmatprep.subr.mxu0 0.0
  %686 = vmatpush1.msra.mxu0 0.0
  %687 = vmatprep.subr.mxu0 0.0
  %688 = vmatpush1.msra.mxu0 0.0
  %689 = vmatprep.subr.mxu0 0.0
  %690 = vmatpush1.msra.mxu0 0.0
  %691 = vmatprep.subr.mxu0 0.0
  %692 = vmatpush1.msra.mxu0 0.0
  %693 = vmatprep.subr.mxu0 0.0
  %694 = vmatpush1.msra.mxu0 0.0
  %695 = vmatprep.subr.mxu0 0.0
  %696 = vmatpush1.msra.mxu0 0.0
  %697 = vmatprep.subr.mxu0 0.0
  %698 = vmatpush1.msra.mxu0 0.0
  %699 = vmatprep.subr.mxu0 0.0
  %700 = vmatpush1.msra.mxu0 0.0
  %701 = vmatprep.subr.mxu0 0.0
  %702 = vmatpush1.msra.mxu0 0.0
  %703 = vmatprep.subr.mxu0 0.0
  %704 = vmatpush1.msra.mxu0 0.0
  %705 = vmatprep.subr.mxu0 0.0
  %706 = vmatpush1.msra.mxu0 0.0
  %707 = vmatprep.subr.mxu0 0.0
  %708 = vmatpush1.msra.mxu0 0.0
  %709 = vmatprep.subr.mxu0 0.0
  %710 = vmatpush1.msra.mxu0 %v136
  %711 = vmatprep.subr.mxu0 0.0
  %712 = vmatpush1.msra.mxu0 %v135
  %713 = vmatprep.subr.mxu0 0.0
  %714 = vmatpush1.msra.mxu0 %v134
  %715 = vmatprep.subr.mxu0 0.0
  %716 = vmatpush1.msra.mxu0 %v133
  %717 = vmatprep.subr.mxu0 0.0
  %718 = vmatpush2.msra.mxu0 0.0
  %719 = vmatprep.subr.mxu0 0.0
  %720 = vmatpush2.msra.mxu0 0.0
  %721 = vmatprep.subr.mxu0 0.0
  %722 = vmatpush2.msra.mxu0 0.0
  %723 = vmatprep.subr.mxu0 0.0
  %724 = vmatpush2.msra.mxu0 0.0
  %725 = vmatprep.subr.mxu0 0.0
  %726 = vmatpush2.msra.mxu0 0.0
  %727 = vmatprep.subr.mxu0 0.0
  %728 = vmatpush2.msra.mxu0 0.0
  %729 = vmatprep.subr.mxu0 0.0
  %730 = vmatpush2.msra.mxu0 0.0
  %731 = vmatprep.subr.mxu0 0.0
  %732 = vmatpush2.msra.mxu0 0.0
  %733 = vmatprep.subr.mxu0 0.0
  %734 = vmatpush2.msra.mxu0 0.0
  %735 = vmatprep.subr.mxu0 0.0
  %736 = vmatpush2.msra.mxu0 0.0
  %737 = vmatprep.subr.mxu0 0.0
  %738 = vmatpush2.msra.mxu0 0.0
  %739 = vmatprep.subr.mxu0 0.0
  %740 = vmatpush2.msra.mxu0 0.0
  %741 = vmatprep.subr.mxu0 0.0
  %742 = vmatpush2.msra.mxu0 0.0
  %743 = vmatprep.subr.mxu0 0.0
  %744 = vmatpush2.msra.mxu0 0.0
  %745 = vmatprep.subr.mxu0 0.0
  %746 = vmatpush2.msra.mxu0 0.0
  %747 = vmatprep.subr.mxu0 0.0
  %748 = vmatpush2.msra.mxu0 0.0
  %749 = vmatprep.mubr.f32.mxu0 0.0
  %750 = vmatmul.mubr.f32.gmra.mxu0 %v683
  %v751 = vpop.f32.mrf.mxu0
  %v752 = vadd.f32 0.0, %v751
  %v753 = vpop.f32.mrf.mxu0
  %754 = vdwg.mxu0
  %v756 = vrot.slane %v752, 6
  %v758 = vadd.f32 %v130, %v756
  %v759 = vxor.u32 %v758, 2147483648
  %v760 = vmul.f32 %v759, 1.442695
  %v761 = vpow.pop %v760
  %v762 = vadd.f32 %v761, 1.0
  %v763 = vrcp.pop %v762
  %v764 = vmul.f32 1.0, %v763
  %v765 = vtanh.pop %v758
  %v767 = vrot.slane %v671, 6
  %v769 = vmul.f32 %v764, %v767
  %771 = vrot.lane.b32.xlu0 %v765, 64
  %v772 = vpop.permute.xlu0 %771
  %v774 = vmul.f32 %v764, %v772
  %776 = vrot.lane.b32.xlu0 %v774, 32
  %v777 = vpop.permute.xlu0 %776
  %v779 = vadd.f32 %v769, %v777
  %v780 = vtanh.pop %v779
  %782 = vrot.lane.b32.xlu0 %v780, 64
  %v783 = vpop.permute.xlu0 %782
  %v785 = vmul.f32 %v764, %v783
  %787 = vrot.lane.b32.xlu0 %v785, 32
  %v788 = vpop.permute.xlu0 %787
  %790 = vst.msk [vmem:[#allocation2 + $0x8] sm:$0xc] %vm349, %v788
  %v791 = vrot.slane %v785, 2
  %792 = vrot.lane.b32.xlu0 %v791, 32
  %v793 = vpop.permute.xlu0 %792
  %v794 = vsel %vm137, %v793, 0
  %796 = vmatprep.subr.mxu0 0.0
  %797 = vmatpush1.msra.mxu0 0.0
  %798 = vmatprep.subr.mxu0 0.0
  %799 = vmatpush1.msra.mxu0 0.0
  %800 = vmatprep.subr.mxu0 0.0
  %801 = vmatpush1.msra.mxu0 0.0
  %802 = vmatprep.subr.mxu0 0.0
  %803 = vmatpush1.msra.mxu0 0.0
  %804 = vmatprep.subr.mxu0 0.0
  %805 = vmatpush1.msra.mxu0 0.0
  %806 = vmatprep.subr.mxu0 0.0
  %807 = vmatpush1.msra.mxu0 0.0
  %808 = vmatprep.subr.mxu0 0.0
  %809 = vmatpush1.msra.mxu0 0.0
  %810 = vmatprep.subr.mxu0 0.0
  %811 = vmatpush1.msra.mxu0 0.0
  %812 = vmatprep.subr.mxu0 0.0
  %813 = vmatpush1.msra.mxu0 0.0
  %814 = vmatprep.subr.mxu0 0.0
  %815 = vmatpush1.msra.mxu0 0.0
  %816 = vmatprep.subr.mxu0 0.0
  %817 = vmatpush1.msra.mxu0 0.0
  %818 = vmatprep.subr.mxu0 0.0
  %819 = vmatpush1.msra.mxu0 0.0
  %820 = vmatprep.subr.mxu0 0.0
  %821 = vmatpush1.msra.mxu0 %v136
  %822 = vmatprep.subr.mxu0 0.0
  %823 = vmatpush1.msra.mxu0 %v135
  %824 = vmatprep.subr.mxu0 0.0
  %825 = vmatpush1.msra.mxu0 %v134
  %826 = vmatprep.subr.mxu0 0.0
  %827 = vmatpush1.msra.mxu0 %v133
  %828 = vmatprep.subr.mxu0 0.0
  %829 = vmatpush2.msra.mxu0 0.0
  %830 = vmatprep.subr.mxu0 0.0
  %831 = vmatpush2.msra.mxu0 0.0
  %832 = vmatprep.subr.mxu0 0.0
  %833 = vmatpush2.msra.mxu0 0.0
  %834 = vmatprep.subr.mxu0 0.0
  %835 = vmatpush2.msra.mxu0 0.0
  %836 = vmatprep.subr.mxu0 0.0
  %837 = vmatpush2.msra.mxu0 0.0
  %838 = vmatprep.subr.mxu0 0.0
  %839 = vmatpush2.msra.mxu0 0.0
  %840 = vmatprep.subr.mxu0 0.0
  %841 = vmatpush2.msra.mxu0 0.0
  %842 = vmatprep.subr.mxu0 0.0
  %843 = vmatpush2.msra.mxu0 0.0
  %844 = vmatprep.subr.mxu0 0.0
  %845 = vmatpush2.msra.mxu0 0.0
  %846 = vmatprep.subr.mxu0 0.0
  %847 = vmatpush2.msra.mxu0 0.0
  %848 = vmatprep.subr.mxu0 0.0
  %849 = vmatpush2.msra.mxu0 0.0
  %850 = vmatprep.subr.mxu0 0.0
  %851 = vmatpush2.msra.mxu0 0.0
  %852 = vmatprep.subr.mxu0 0.0
  %853 = vmatpush2.msra.mxu0 0.0
  %854 = vmatprep.subr.mxu0 0.0
  %855 = vmatpush2.msra.mxu0 0.0
  %856 = vmatprep.subr.mxu0 0.0
  %857 = vmatpush2.msra.mxu0 0.0
  %858 = vmatprep.subr.mxu0 0.0
  %859 = vmatpush2.msra.mxu0 0.0
  %860 = vmatprep.mubr.f32.mxu0 0.0
  %861 = vmatmul.mubr.f32.gmra.mxu0 %v794
  %v862 = vpop.f32.mrf.mxu0
  %v863 = vadd.f32 0.0, %v862
  %v864 = vpop.f32.mrf.mxu0
  %865 = vdwg.mxu0
  %v867 = vrot.slane %v863, 4
  %v869 = vadd.f32 %v130, %v867
  %v870 = vxor.u32 %v869, 2147483648
  %v871 = vmul.f32 %v870, 1.442695
  %v872 = vpow.pop %v871
  %v873 = vadd.f32 %v872, 1.0
  %v874 = vrcp.pop %v873
  %v875 = vmul.f32 1.0, %v874
  %v876 = vtanh.pop %v869
  %v878 = vrot.slane %v779, 6
  %v880 = vmul.f32 %v875, %v878
  %882 = vrot.lane.b32.xlu0 %v876, 64
  %v883 = vpop.permute.xlu0 %882
  %v885 = vmul.f32 %v875, %v883
  %887 = vrot.lane.b32.xlu0 %v885, 32
  %v888 = vpop.permute.xlu0 %887
  %v890 = vadd.f32 %v880, %v888
  %v891 = vtanh.pop %v890
  %893 = vrot.lane.b32.xlu0 %v891, 64
  %v894 = vpop.permute.xlu0 %893
  %v896 = vmul.f32 %v875, %v894
  %898 = vrot.lane.b32.xlu0 %v896, 32
  %v899 = vpop.permute.xlu0 %898
  %901 = vst.msk [vmem:[#allocation2 + $0x8] sm:$0x30] %vm461, %v899
  %v902 = vrot.slane %v896, 4
  %903 = vrot.lane.b32.xlu0 %v902, 32
  %v904 = vpop.permute.xlu0 %903
  %v905 = vsel %vm137, %v904, 0
  %907 = vmatprep.subr.mxu0 0.0
  %908 = vmatpush1.msra.mxu0 0.0
  %909 = vmatprep.subr.mxu0 0.0
  %910 = vmatpush1.msra.mxu0 0.0
  %911 = vmatprep.subr.mxu0 0.0
  %912 = vmatpush1.msra.mxu0 0.0
  %913 = vmatprep.subr.mxu0 0.0
  %914 = vmatpush1.msra.mxu0 0.0
  %915 = vmatprep.subr.mxu0 0.0
  %916 = vmatpush1.msra.mxu0 0.0
  %917 = vmatprep.subr.mxu0 0.0
  %918 = vmatpush1.msra.mxu0 0.0
  %919 = vmatprep.subr.mxu0 0.0
  %920 = vmatpush1.msra.mxu0 0.0
  %921 = vmatprep.subr.mxu0 0.0
  %922 = vmatpush1.msra.mxu0 0.0
  %923 = vmatprep.subr.mxu0 0.0
  %924 = vmatpush1.msra.mxu0 0.0
  %925 = vmatprep.subr.mxu0 0.0
  %926 = vmatpush1.msra.mxu0 0.0
  %927 = vmatprep.subr.mxu0 0.0
  %928 = vmatpush1.msra.mxu0 0.0
  %929 = vmatprep.subr.mxu0 0.0
  %930 = vmatpush1.msra.mxu0 0.0
  %931 = vmatprep.subr.mxu0 0.0
  %932 = vmatpush1.msra.mxu0 %v136
  %933 = vmatprep.subr.mxu0 0.0
  %934 = vmatpush1.msra.mxu0 %v135
  %935 = vmatprep.subr.mxu0 0.0
  %936 = vmatpush1.msra.mxu0 %v134
  %937 = vmatprep.subr.mxu0 0.0
  %938 = vmatpush1.msra.mxu0 %v133
  %939 = vmatprep.subr.mxu0 0.0
  %940 = vmatpush2.msra.mxu0 0.0
  %941 = vmatprep.subr.mxu0 0.0
  %942 = vmatpush2.msra.mxu0 0.0
  %943 = vmatprep.subr.mxu0 0.0
  %944 = vmatpush2.msra.mxu0 0.0
  %945 = vmatprep.subr.mxu0 0.0
  %946 = vmatpush2.msra.mxu0 0.0
  %947 = vmatprep.subr.mxu0 0.0
  %948 = vmatpush2.msra.mxu0 0.0
  %949 = vmatprep.subr.mxu0 0.0
  %950 = vmatpush2.msra.mxu0 0.0
  %951 = vmatprep.subr.mxu0 0.0
  %952 = vmatpush2.msra.mxu0 0.0
  %953 = vmatprep.subr.mxu0 0.0
  %954 = vmatpush2.msra.mxu0 0.0
  %955 = vmatprep.subr.mxu0 0.0
  %956 = vmatpush2.msra.mxu0 0.0
  %957 = vmatprep.subr.mxu0 0.0
  %958 = vmatpush2.msra.mxu0 0.0
  %959 = vmatprep.subr.mxu0 0.0
  %960 = vmatpush2.msra.mxu0 0.0
  %961 = vmatprep.subr.mxu0 0.0
  %962 = vmatpush2.msra.mxu0 0.0
  %963 = vmatprep.subr.mxu0 0.0
  %964 = vmatpush2.msra.mxu0 0.0
  %965 = vmatprep.subr.mxu0 0.0
  %966 = vmatpush2.msra.mxu0 0.0
  %967 = vmatprep.subr.mxu0 0.0
  %968 = vmatpush2.msra.mxu0 0.0
  %969 = vmatprep.subr.mxu0 0.0
  %970 = vmatpush2.msra.mxu0 0.0
  %971 = vmatprep.mubr.f32.mxu0 0.0
  %972 = vmatmul.mubr.f32.gmra.mxu0 %v905
  %v973 = vpop.f32.mrf.mxu0
  %v974 = vadd.f32 0.0, %v973
  %v975 = vpop.f32.mrf.mxu0
  %976 = vdwg.mxu0
  %v978 = vrot.slane %v974, 2
  %v980 = vadd.f32 %v130, %v978
  %v981 = vxor.u32 %v980, 2147483648
  %v982 = vmul.f32 %v981, 1.442695
  %v983 = vpow.pop %v982
  %v984 = vadd.f32 %v983, 1.0
  %v985 = vrcp.pop %v984
  %v986 = vmul.f32 1.0, %v985
  %v987 = vtanh.pop %v980
  %v989 = vrot.slane %v890, 6
  %v991 = vmul.f32 %v986, %v989
  %993 = vrot.lane.b32.xlu0 %v987, 64
  %v994 = vpop.permute.xlu0 %993
  %v996 = vmul.f32 %v986, %v994
  %998 = vrot.lane.b32.xlu0 %v996, 32
  %v999 = vpop.permute.xlu0 %998
  %v1001 = vadd.f32 %v991, %v999
  %v1002 = vtanh.pop %v1001
  %1004 = vrot.lane.b32.xlu0 %v1002, 64
  %v1005 = vpop.permute.xlu0 %1004
  %v1007 = vmul.f32 %v986, %v1005
  %1009 = vrot.lane.b32.xlu0 %v1007, 32
  %v1010 = vpop.permute.xlu0 %1009
  %1012 = vst.msk [vmem:[#allocation2 + $0x8] sm:$0xc0] %vm573, %v1010
  %v1013 = vld [vmem:[#allocation2] sm:$0xff]
  %v1014 = vld [vmem:[#allocation2 + $0x8] sm:$0xff]
  %v1015 = vld [vmem:[%s4] sm:$0xff]
  %v1016 = vld [vmem:[%s4 + $0x8] sm:$0xff]
  %v1017 = vld [vmem:[%s4 + $0x10] sm:$0xff]
  %v1018 = vld [vmem:[%s4 + $0x18] sm:$0xff]
  %v1019 = vld [vmem:[%s5] sm:$0x1]
  %v1021 = vlaneseq
  %v1022 = vshrl.u32 %v1021, 7
  %v1023 = vsub.s32 0, %v1022
  %v1024 = vrot.slane %v1019, %v1023
  %v1027 = vsel %vm137, %v1013, 0
  %v1030 = vsel %vm137, %v1014, 0
  %1032 = vmatprep.subr.mxu0 0.0
  %1033 = vmatpush1.msra.mxu0 0.0
  %1034 = vmatprep.subr.mxu0 0.0
  %1035 = vmatpush1.msra.mxu0 0.0
  %1036 = vmatprep.subr.mxu0 0.0
  %1037 = vmatpush1.msra.mxu0 0.0
  %1038 = vmatprep.subr.mxu0 0.0
  %1039 = vmatpush1.msra.mxu0 0.0
  %1040 = vmatprep.subr.mxu0 0.0
  %1041 = vmatpush1.msra.mxu0 0.0
  %1042 = vmatprep.subr.mxu0 0.0
  %1043 = vmatpush1.msra.mxu0 0.0
  %1044 = vmatprep.subr.mxu0 0.0
  %1045 = vmatpush1.msra.mxu0 0.0
  %1046 = vmatprep.subr.mxu0 0.0
  %1047 = vmatpush1.msra.mxu0 0.0
  %1048 = vmatprep.subr.mxu0 0.0
  %1049 = vmatpush1.msra.mxu0 0.0
  %1050 = vmatprep.subr.mxu0 0.0
  %1051 = vmatpush1.msra.mxu0 0.0
  %1052 = vmatprep.subr.mxu0 0.0
  %1053 = vmatpush1.msra.mxu0 0.0
  %1054 = vmatprep.subr.mxu0 0.0
  %1055 = vmatpush1.msra.mxu0 0.0
  %1056 = vmatprep.subr.mxu0 0.0
  %1057 = vmatpush1.msra.mxu0 %v1018
  %1058 = vmatprep.subr.mxu0 0.0
  %1059 = vmatpush1.msra.mxu0 %v1017
  %1060 = vmatprep.subr.mxu0 0.0
  %1061 = vmatpush1.msra.mxu0 %v1016
  %1062 = vmatprep.subr.mxu0 0.0
  %1063 = vmatpush1.msra.mxu0 %v1015
  %1064 = vmatprep.subr.mxu0 0.0
  %1065 = vmatpush2.msra.mxu0 0.0
  %1066 = vmatprep.subr.mxu0 0.0
  %1067 = vmatpush2.msra.mxu0 0.0
  %1068 = vmatprep.subr.mxu0 0.0
  %1069 = vmatpush2.msra.mxu0 0.0
  %1070 = vmatprep.subr.mxu0 0.0
  %1071 = vmatpush2.msra.mxu0 0.0
  %1072 = vmatprep.subr.mxu0 0.0
  %1073 = vmatpush2.msra.mxu0 0.0
  %1074 = vmatprep.subr.mxu0 0.0
  %1075 = vmatpush2.msra.mxu0 0.0
  %1076 = vmatprep.subr.mxu0 0.0
  %1077 = vmatpush2.msra.mxu0 0.0
  %1078 = vmatprep.subr.mxu0 0.0
  %1079 = vmatpush2.msra.mxu0 0.0
  %1080 = vmatprep.subr.mxu0 0.0
  %1081 = vmatpush2.msra.mxu0 0.0
  %1082 = vmatprep.subr.mxu0 0.0
  %1083 = vmatpush2.msra.mxu0 0.0
  %1084 = vmatprep.subr.mxu0 0.0
  %1085 = vmatpush2.msra.mxu0 0.0
  %1086 = vmatprep.subr.mxu0 0.0
  %1087 = vmatpush2.msra.mxu0 0.0
  %1088 = vmatprep.subr.mxu0 0.0
  %1089 = vmatpush2.msra.mxu0 0.0
  %1090 = vmatprep.subr.mxu0 0.0
  %1091 = vmatpush2.msra.mxu0 0.0
  %1092 = vmatprep.subr.mxu0 0.0
  %1093 = vmatpush2.msra.mxu0 0.0
  %1094 = vmatprep.subr.mxu0 0.0
  %1095 = vmatpush2.msra.mxu0 0.0
  %1096 = vmatprep.mubr.f32.mxu0 0.0
  %1097 = vmatmul.mubr.f32.gmra.mxu0 %v1027
  %v1098 = vpop.f32.mrf.mxu0
  %v1099 = vadd.f32 %v1024, %v1098
  %v1100 = vpop.f32.mrf.mxu0
  %1101 = vmatprep.mubr.f32.mxu0 0.0
  %1102 = vmatmul.mubr.f32.gmra.mxu0 %v1030
  %v1103 = vpop.f32.mrf.mxu0
  %v1104 = vadd.f32 %v1024, %v1103
  %v1105 = vpop.f32.mrf.mxu0
  %1106 = vdwg.mxu0
  %vm1107 = vcmask 130048
  %v1108 = vsel %vm1107, %v1099, 0.0
  %v1109 = vsel %vm1107, %v1104, 0.0
  %v1110 = vadd.f32 %v1108, %v1109
  %v1111 = vrot.slane %v1110, 4
  %v1112 = vadd.f32 %v1110, %v1111
  %v1113 = vrot.slane %v1112, 2
  %v1114 = vadd.f32 %v1112, %v1113
  %v1115 = vrot.slane %v1114, 1
  %v1116 = vadd.f32 %v1114, %v1115
  %v1117 = vrcp.pop 16.0
  %v1118 = vmul.f32 %v1116, %v1117
  %v1119 = vsub.f32 %v1099, %v1118
  %v1120 = vsub.f32 %v1104, %v1118
  %v1121 = vmul.f32 %v1119, %v1119
  %v1122 = vmul.f32 %v1120, %v1120
  %v1123 = vsel %vm1107, %v1121, 0.0
  %v1124 = vsel %vm1107, %v1122, 0.0
  %v1125 = vadd.f32 %v1123, %v1124
  %v1126 = vrot.slane %v1125, 4
  %v1127 = vadd.f32 %v1125, %v1126
  %v1128 = vrot.slane %v1127, 2
  %v1129 = vadd.f32 %v1127, %v1128
  %v1130 = vrot.slane %v1129, 1
  %v1131 = vadd.f32 %v1129, %v1130
  %v1132 = vmul.f32 %v1131, %v1117
  %v1133 = vadd.f32 %v1132, 1e-05
  %v1134 = vrsqrt.pop %v1133
  %v1135 = vmul.f32 %v1119, %v1134
  %v1136 = vmul.f32 %v1120, %v1134
  %v1137 = vld [vmem:[%s6] sm:$0x1]
  %v1139 = vlaneseq
  %v1140 = vshrl.u32 %v1139, 7
  %v1141 = vsub.s32 0, %v1140
  %v1142 = vrot.slane %v1137, %v1141
  %v1144 = vmul.f32 %v1135, %v1142
  %v1145 = vmul.f32 %v1136, %v1142
  %v1146 = vld [vmem:[%s7] sm:$0x1]
  %v1148 = vlaneseq
  %v1149 = vshrl.u32 %v1148, 7
  %v1150 = vsub.s32 0, %v1149
  %v1151 = vrot.slane %v1146, %v1150
  %v1153 = vadd.f32 %v1144, %v1151
  %v1154 = vadd.f32 %v1145, %v1151
  %v1155 = vmax.f32 %v1153, 0.0
  %v1156 = vmax.f32 %v1154, 0.0
  %v1157 = vld [vmem:[%s8] sm:$0x1]
  %v1159 = vlaneseq
  %v1160 = vshrl.u32 %v1159, 7
  %v1161 = vsub.s32 0, %v1160
  %v1162 = vrot.slane %v1157, %v1161
  %v1164 = vmul.f32 %v1155, %v1162
  %v1165 = vmul.f32 %v1156, %v1162
  %v1166 = vsel %vm1107, %v1164, 0.0
  %1167 = vadd.xlane.f32.xlu0 %v1166
  %v1168 = vpop.xlane.xlu0 %1167
  %v1169 = vsel %vm1107, %v1165, 0.0
  %1170 = vadd.xlane.f32.xlu0 %v1169
  %v1171 = vpop.xlane.xlu0 %1170
  %v1172 = vld [vmem:[#allocation3] sm:$0x1]
  %v1174 = vlaneseq
  %v1175 = vshrl.u32 %v1174, 7
  %v1176 = vsub.s32 0, %v1175
  %v1177 = vrot.slane %v1172, %v1176
  %v1179 = vadd.f32 %v1168, %v1177
  %v1180 = vadd.f32 %v1171, %v1177
  %1182 = vset.pattern.permute.xlu0 0
  %1183 = vperm.xlu0 %1182, %v1179
  %v1184 = vpop.permute.xlu0 %1183
  %1187 = vset.pattern.permute.xlu0 0
  %1188 = vperm.xlu0 %1187, %v1180
  %v1189 = vpop.permute.xlu0 %1188
  %1191 = vst [vmem:[%s10] sm:$0xff] %v1184
  %1192 = vst [vmem:[%s10 + $0x8] sm:$0xff] %v1189
  // Predicated region
  $region42: #{rnn_lstm_forward.1} parent=0 // pred_check
    _
  $region43: #{rnn_lstm_forward.1} parent=0 // pred_check_branch
    %1194 = sbr.rel (0) target = $region45
  $region44: #{rnn_lstm_forward.1} parent=0 // pred_region
    _
  $region45: #{rnn_lstm_forward.1} parent=0 // pred_fallthru
    _
  // Predicated region
  $region46: #{rnn_lstm_forward.1} parent=0 // pred_check
    _
  $region47: #{rnn_lstm_forward.1} parent=0 // pred_check_branch
    %1196 = sbr.rel (0) target = $region49
  $region48: #{rnn_lstm_forward.1} parent=0 // pred_region
    _
  $region49: #{rnn_lstm_forward.1} parent=0 // pred_fallthru
    _

</llo_original>
